<compile_context>
chip_gen: v6e
topology: v6e:2x2x1
jax: 0.10.0
libtpu: 0.0.40
codegen_flags: <defaults>
</compile_context>

<pallas_src>
import functools

import jax
import jax.numpy as jnp
from jax.experimental import pallas as pl
from jax.experimental.pallas import tpu as pltpu


def _round_up(x: int, m: int) -> int:
    return (x + m - 1) // m * m


# ----------------------------- Pallas kernel -------------------------------

def _fused_mlp_kernel(action_ref, state_ref, params_ref, out_ref, *,
                      n_layers: int, action_dim: int, state_dim: int,
                      batch: int, padc: int,
                      wa_off: int, ws_off: int,
                      w_offs: tuple, b_offs: tuple):
    """Fused concat + MLP; all parameters live in ONE packed VMEM buffer."""
    dot = functools.partial(jnp.dot, preferred_element_type=jnp.float32,
                            precision=jax.lax.Precision.HIGHEST)

    # torch: x = cat(action, state).float()  -> cast in-kernel (free VPU slack),
    # no wrapper-side convert dispatch.
    a = action_ref[...].astype(jnp.float32)
    s = state_ref[...].astype(jnp.float32)

    # Layer 0: action @ W_a + state @ W_s + b0 == concat(action, state) @ W0 + b0.
    w_a = params_ref[wa_off:wa_off + action_dim, :]
    w_s = params_ref[ws_off:ws_off + state_dim, :]
    b0 = params_ref[b_offs[0]:b_offs[0] + batch, :]      # pre-broadcast bias rows
    x = dot(a, w_a) + dot(s, w_s) + b0
    if n_layers > 1:
        x = jnp.maximum(x, 0.0)

    # Remaining layers (straight-line; activations never leave vregs/VMEM).
    # Weight blocks are zero-padded to (padc, padc): padded activation columns are
    # exactly zero, so the extra weight rows contribute nothing.
    for li in range(1, n_layers):
        w = params_ref[w_offs[li - 1]:w_offs[li - 1] + padc, :]
        b = params_ref[b_offs[li]:b_offs[li] + batch, :]
        x = dot(x, w) + b
        if li < n_layers - 1:                  # ReLU between layers, none on last
            x = jnp.maximum(x, 0.0)

    out_ref[...] = x[:, :state_dim].astype(out_ref.dtype)


# ------------------------- init / param packing -----------------------------

def init_dynamics_params(key, state_dim: int, action_dim: int,
                         hidden_dim: int, hidden_layers: int):
    """nn.Linear-style init (uniform in [-1/sqrt(fan_in), 1/sqrt(fan_in)]).

    Returns list of (w, b) with w: (d_in, d_out) (transpose of torch layout),
    b: (1, d_out).  Layer 0's d_in is action_dim + state_dim (concat order:
    action columns first, matching torch.cat((action, state), dim=-1)).
    """
    dims = [state_dim + action_dim] + [hidden_dim] * hidden_layers + [state_dim]
    layers = []
    for i in range(len(dims) - 1):
        din, dout = dims[i], dims[i + 1]
        kw, kb = jax.random.split(jax.random.fold_in(key, i))
        bound = 1.0 / (din ** 0.5)
        w = jax.random.uniform(kw, (din, dout), jnp.float32, -bound, bound)
        b = jax.random.uniform(kb, (1, dout), jnp.float32, -bound, bound)
        layers.append((w, b))
    return layers


def _pad2d(a, rows: int, cols: int):
    return jnp.zeros((rows, cols), jnp.float32).at[:a.shape[0], :a.shape[1]].set(
        a.astype(jnp.float32))


def pack_dynamics_params(layers, action_dim: int, state_dim: int, batch: int):
    """Pack every weight/bias into ONE (total_rows, padc) f32 buffer.

    Layout (all row offsets multiples of 8):
      [ W_a (rnd8(action_dim) rows) | W_s (rnd8(state_dim) rows) |
        b0 broadcast to rnd8(batch) rows |
        W_1 (padc rows) | b_1 (rnd8(batch) rows) | ... ]
    Columns are zero-padded to padc = rnd128(max layer width).
    """
    douts = [int(w.shape[1]) for w, _ in layers]
    padc = _round_up(max(douts), 128)
    brows = _round_up(max(batch, 1), 8)

    blocks, row = [], 0

    def push(block):
        nonlocal row
        off = row
        blocks.append(block)
        row += block.shape[0]
        return off

    w0, b0 = layers[0]
    wa_off = push(_pad2d(w0[:action_dim, :], _round_up(action_dim, 8), padc))
    ws_off = push(_pad2d(w0[action_dim:, :], _round_up(state_dim, 8), padc))
    b_offs = [push(_pad2d(jnp.tile(b0, (brows, 1)), brows, padc))]
    w_offs = []
    for (w, b) in layers[1:]:
        w_offs.append(push(_pad2d(w, padc, padc)))
        b_offs.append(push(_pad2d(jnp.tile(b, (brows, 1)), brows, padc)))

    packed = jnp.concatenate(blocks, axis=0)
    layout = dict(padc=padc, wa_off=wa_off, ws_off=ws_off,
                  w_offs=tuple(w_offs), b_offs=tuple(b_offs))
    return packed, layout


# ----------------------------- forward wrapper -------------------------------

def build_dynamics_forward(layout, *, state_dim: int, action_dim: int,
                           n_layers: int, batch: int):
    kernel = functools.partial(
        _fused_mlp_kernel,
        n_layers=n_layers, action_dim=action_dim, state_dim=state_dim,
        batch=batch, **layout)
    vmem = pl.BlockSpec(memory_space=pltpu.MemorySpace.VMEM)

    @jax.jit
    def forward(packed_params, action, state):
        return pl.pallas_call(
            kernel,
            out_shape=jax.ShapeDtypeStruct((batch, state_dim), jnp.float32),
            in_specs=[vmem, vmem, vmem],
            out_specs=vmem,
        )(action, state, packed_params)

    return forward


# ---------------------------------- main ------------------------------------

if __name__ == "__main__":
    state_dim = 8
    action_dim = 4
    hidden_dim = 32
    hidden_layers = 2
    batch = 8

    key = jax.random.PRNGKey(0)
    k_params, k_action, k_state = jax.random.split(key, 3)

    layers = init_dynamics_params(k_params, state_dim, action_dim,
                                  hidden_dim, hidden_layers)
    packed, layout = pack_dynamics_params(layers, action_dim, state_dim, batch)
    forward = build_dynamics_forward(layout, state_dim=state_dim,
                                     action_dim=action_dim,
                                     n_layers=len(layers), batch=batch)

    action = jax.random.normal(k_action, (batch, action_dim), jnp.float32)
    state = jax.random.normal(k_state, (batch, state_dim), jnp.float32)

    out = jax.block_until_ready(forward(packed, action, state))

    # Pure-JAX reference (explicit concat, unsplit / unpadded weights).
    x_ref = jnp.concatenate([action, state], axis=-1).astype(jnp.float32)
    for i, (w, b) in enumerate(layers):
        x_ref = jnp.dot(x_ref, w, precision=jax.lax.Precision.HIGHEST) + b
        if i < len(layers) - 1:
            x_ref = jnp.maximum(x_ref, 0.0)

    assert out.shape == (batch, state_dim)
    assert jnp.allclose(out, x_ref, atol=1e-5, rtol=1e-5)

    print("KERNEL_OK")
</pallas_src>

<mosaic_0001>
module attributes {stable_mosaic.version = 11 : i64} {
  func.func @_fused_mlp_kernel(%arg0: memref<8x4xf32, #tpu.memory_space<vmem>>, %arg1: memref<8x8xf32, #tpu.memory_space<vmem>>, %arg2: memref<296x128xf32, #tpu.memory_space<vmem>>, %arg3: memref<8x8xf32, #tpu.memory_space<vmem>>) attributes {dimension_semantics = [], scalar_prefetch = 0 : i64, scratch_operands = 0 : i64, tpu.core_type = #tpu.core_type<tc>} {
    %c0 = arith.constant 0 : index
    %c0_0 = arith.constant 0 : index
    %0 = vector.load %arg0[%c0, %c0_0] : memref<8x4xf32, #tpu.memory_space<vmem>>, vector<8x4xf32>
    %c0_1 = arith.constant 0 : index
    %c0_2 = arith.constant 0 : index
    %1 = vector.load %arg1[%c0_1, %c0_2] : memref<8x8xf32, #tpu.memory_space<vmem>>, vector<8x8xf32>
    %c0_3 = arith.constant 0 : index
    %c0_4 = arith.constant 0 : index
    %2 = vector.load %arg2[%c0_3, %c0_4] : memref<296x128xf32, #tpu.memory_space<vmem>>, vector<4x128xf32>
    %c8 = arith.constant 8 : index
    %c0_5 = arith.constant 0 : index
    %3 = vector.load %arg2[%c8, %c0_5] : memref<296x128xf32, #tpu.memory_space<vmem>>, vector<8x128xf32>
    %c16 = arith.constant 16 : index
    %c0_6 = arith.constant 0 : index
    %4 = vector.load %arg2[%c16, %c0_6] : memref<296x128xf32, #tpu.memory_space<vmem>>, vector<8x128xf32>
    %cst = arith.constant dense<0.000000e+00> : vector<8x128xf32>
    %5 = tpu.matmul %0, %2, %cst {dimension_numbers = #tpu.dot_dimension_numbers<[1], [0], [0], [1], [0, 0, 1, 1], [], []>, precision = #tpu.contract_precision<fp32>} : vector<8x4xf32>, vector<4x128xf32>, vector<8x128xf32> -> vector<8x128xf32>
    %cst_7 = arith.constant dense<0.000000e+00> : vector<8x128xf32>
    %6 = tpu.matmul %1, %3, %cst_7 {dimension_numbers = #tpu.dot_dimension_numbers<[1], [0], [0], [1], [0, 0, 1, 1], [], []>, precision = #tpu.contract_precision<fp32>} : vector<8x8xf32>, vector<8x128xf32>, vector<8x128xf32> -> vector<8x128xf32>
    %7 = arith.addf %5, %6 : vector<8x128xf32>
    %8 = arith.addf %7, %4 : vector<8x128xf32>
    %cst_8 = arith.constant 0.000000e+00 : f32
    %9 = vector.broadcast %cst_8 : f32 to vector<8x128xf32>
    %10 = arith.maximumf %8, %9 : vector<8x128xf32>
    %c24 = arith.constant 24 : index
    %c0_9 = arith.constant 0 : index
    %11 = vector.load %arg2[%c24, %c0_9] : memref<296x128xf32, #tpu.memory_space<vmem>>, vector<128x128xf32>
    %c152 = arith.constant 152 : index
    %c0_10 = arith.constant 0 : index
    %12 = vector.load %arg2[%c152, %c0_10] : memref<296x128xf32, #tpu.memory_space<vmem>>, vector<8x128xf32>
    %cst_11 = arith.constant dense<0.000000e+00> : vector<8x128xf32>
    %13 = tpu.matmul %10, %11, %cst_11 {dimension_numbers = #tpu.dot_dimension_numbers<[1], [0], [0], [1], [0, 0, 1, 1], [], []>, precision = #tpu.contract_precision<fp32>} : vector<8x128xf32>, vector<128x128xf32>, vector<8x128xf32> -> vector<8x128xf32>
    %14 = arith.addf %13, %12 : vector<8x128xf32>
    %cst_12 = arith.constant 0.000000e+00 : f32
    %15 = vector.broadcast %cst_12 : f32 to vector<8x128xf32>
    %16 = arith.maximumf %14, %15 : vector<8x128xf32>
    %c160 = arith.constant 160 : index
    %c0_13 = arith.constant 0 : index
    %17 = vector.load %arg2[%c160, %c0_13] : memref<296x128xf32, #tpu.memory_space<vmem>>, vector<128x128xf32>
    %c288 = arith.constant 288 : index
    %c0_14 = arith.constant 0 : index
    %18 = vector.load %arg2[%c288, %c0_14] : memref<296x128xf32, #tpu.memory_space<vmem>>, vector<8x128xf32>
    %cst_15 = arith.constant dense<0.000000e+00> : vector<8x128xf32>
    %19 = tpu.matmul %16, %17, %cst_15 {dimension_numbers = #tpu.dot_dimension_numbers<[1], [0], [0], [1], [0, 0, 1, 1], [], []>, precision = #tpu.contract_precision<fp32>} : vector<8x128xf32>, vector<128x128xf32>, vector<8x128xf32> -> vector<8x128xf32>
    %20 = arith.addf %19, %18 : vector<8x128xf32>
    %21 = vector.extract_strided_slice %20 {offsets = [0, 0], sizes = [8, 8], strides = [1, 1]} : vector<8x128xf32> to vector<8x8xf32>
    %c0_16 = arith.constant 0 : index
    %c0_17 = arith.constant 0 : index
    %22 = vector.load %arg3[%c0_16, %c0_17] : memref<8x8xf32, #tpu.memory_space<vmem>>, vector<8x8xf32>
    tpu.vector_store %arg3[%c0_16, %c0_17], %21 {strides = array<i32>} : memref<8x8xf32, #tpu.memory_space<vmem>>, vector<8x8xf32>,
    return
  }
}

</mosaic_0001>

<llo_original>
// kernel: forward.1
$region0: #{forward.1}
  #allocation0 [shape = 'u32[]', space=smem, size = 0x4, offset = 0x4, fixed_abs, tag = 'smem constant byte address 0x4 - core index']
  #allocation1 [shape = 'u32[144,128]{1,0:T(1,128)}', space=vmem, size = 0x12000, scoped, tag = 'internal scratch']
  %s0 = inlined_call_operand.vmem [shape: f32[8,4], index: 0, kind: input, shape index: {}]
  %s1 = inlined_call_operand.vmem [shape: f32[8,8], index: 1, kind: input, shape index: {}]
  %s2 = inlined_call_operand.hbm [shape: f32[296,128], index: 2, kind: input, shape index: {}]
  %s3 = inlined_call_operand.hbm [shape: f32[8,8], index: 3, kind: output, shape index: {}]
  %s4 = sld [smem:[#allocation0]]
  $region26: #{forward.1} parent=0
    _
  %s6 = ssub.s32 1, %s4
  %s7 = scalar_select 0, %s6, %s4
  $region1: #{forward.1} parent=0
    #allocation2 [shape = 'u8[151552]{0}', space=vmem, size = 0x25000, scoped, tag = 'input window, operand 2, single buffered']
    #allocation3 [shape = 's32[1]{0}', space=sflag, size = 0x4, scoped, tag = 'scoped memory for forward.1']
    #allocation4 [shape = 's32[1]{0}', space=sflag, size = 0x4, scoped, tag = 'scoped memory for forward.1']
    #allocation5 [shape = 'u8[4096]{0}', space=vmem, size = 0x1000, scoped, tag = 'output window, operand 0, single buffered']
    %8 = vsyncpa [#allocation3], 0
    %9 = vsyncpa [#allocation4], 0
    // Predicated region
    $region2: #{forward.1} parent=1 // pred_check
      _
    $region3: #{forward.1} parent=1 // pred_check_branch
      %11 = sbr.rel (0) target = $region5
    $region4: #{forward.1} parent=1 // pred_region
      _
    $region5: #{forward.1} parent=1 // pred_fallthru
      _
    // Predicated region
    $region6: #{forward.1} parent=1 // pred_check
      _
    $region7: #{forward.1} parent=1 // pred_check_branch
      %13 = sbr.rel (0) target = $region9
    $region8: #{forward.1} parent=1 // pred_region
      _
    $region9: #{forward.1} parent=1 // pred_fallthru
      _
    // Predicated region
    $region10: #{forward.1} parent=1 // pred_check
      _
    $region11: #{forward.1} parent=1 // pred_check_branch
      %15 = sbr.rel (0) target = $region13
    $region12: #{forward.1} parent=1 // pred_region
      %s17 = ssub.s32 4736, 4736
      %18 = vsyncadd [#allocation3], %s17
      %s19 = sshll.u32 [#allocation2], 4
      %s20 = int_to_ptr.vmem [resolvable:$true] %s19
      %25 = dma.hbm_to_vmem [thread:$0]  %s2, 4736, %s20, [#allocation3], 128, 128, 8
    $region13: #{forward.1} parent=1 // pred_fallthru
      _
    // Predicated region
    $region14: #{forward.1} parent=1 // pred_check
      _
    $region15: #{forward.1} parent=1 // pred_check_branch
      %27 = sbr.rel (0) target = $region17
    $region16: #{forward.1} parent=1 // pred_region
      %28 = dma.done [#allocation3], 4736
    $region17: #{forward.1} parent=1 // pred_fallthru
      _
    %v29 = vld [vmem:[%s0] sm:$0xff]
    %v30 = vld [vmem:[%s1] sm:$0xff]
    %v31 = vld [vmem:[#allocation2] sm:$0xf]
    %v32 = vld [vmem:[#allocation2 + $0x8] sm:$0xff]
    %v33 = vld [vmem:[#allocation2 + $0x10] sm:$0xff]
    %vm34 = vcmask 64512
    %v36 = vsel %vm34, %v30, 0
    %38 = vmatprep.subr.mxu0 0.0
    %39 = vmatpush1.msra.mxu0 0.0
    %40 = vmatprep.subr.mxu0 0.0
    %41 = vmatpush1.msra.mxu0 0.0
    %42 = vmatprep.subr.mxu0 0.0
    %43 = vmatpush1.msra.mxu0 0.0
    %44 = vmatprep.subr.mxu0 0.0
    %45 = vmatpush1.msra.mxu0 0.0
    %46 = vmatprep.subr.mxu0 0.0
    %47 = vmatpush1.msra.mxu0 0.0
    %48 = vmatprep.subr.mxu0 0.0
    %49 = vmatpush1.msra.mxu0 0.0
    %50 = vmatprep.subr.mxu0 0.0
    %51 = vmatpush1.msra.mxu0 0.0
    %52 = vmatprep.subr.mxu0 0.0
    %53 = vmatpush1.msra.mxu0 0.0
    %54 = vmatprep.subr.mxu0 0.0
    %55 = vmatpush1.msra.mxu0 0.0
    %56 = vmatprep.subr.mxu0 0.0
    %57 = vmatpush1.msra.mxu0 0.0
    %58 = vmatprep.subr.mxu0 0.0
    %59 = vmatpush1.msra.mxu0 0.0
    %60 = vmatprep.subr.mxu0 0.0
    %61 = vmatpush1.msra.mxu0 0.0
    %62 = vmatprep.subr.mxu0 0.0
    %63 = vmatpush1.msra.mxu0 0.0
    %64 = vmatprep.subr.mxu0 0.0
    %65 = vmatpush1.msra.mxu0 0.0
    %66 = vmatprep.subr.mxu0 0.0
    %67 = vmatpush1.msra.mxu0 0.0
    %68 = vmatprep.subr.mxu0 0.0
    %v69 = vand.u32 %v32, 4294901760
    %70 = vmatpush1.msra.mxu0 %v69
    %71 = vmatprep.subr.mxu0 0.0
    %72 = vmatpush2.msra.mxu0 0.0
    %73 = vmatprep.subr.mxu0 0.0
    %74 = vmatpush2.msra.mxu0 0.0
    %75 = vmatprep.subr.mxu0 0.0
    %76 = vmatpush2.msra.mxu0 0.0
    %77 = vmatprep.subr.mxu0 0.0
    %78 = vmatpush2.msra.mxu0 0.0
    %79 = vmatprep.subr.mxu0 0.0
    %80 = vmatpush2.msra.mxu0 0.0
    %81 = vmatprep.subr.mxu0 0.0
    %82 = vmatpush2.msra.mxu0 0.0
    %83 = vmatprep.subr.mxu0 0.0
    %84 = vmatpush2.msra.mxu0 0.0
    %85 = vmatprep.subr.mxu0 0.0
    %86 = vmatpush2.msra.mxu0 0.0
    %87 = vmatprep.subr.mxu0 0.0
    %88 = vmatpush2.msra.mxu0 0.0
    %89 = vmatprep.subr.mxu0 0.0
    %90 = vmatpush2.msra.mxu0 0.0
    %91 = vmatprep.subr.mxu0 0.0
    %92 = vmatpush2.msra.mxu0 0.0
    %93 = vmatprep.subr.mxu0 0.0
    %94 = vmatpush2.msra.mxu0 0.0
    %95 = vmatprep.subr.mxu0 0.0
    %96 = vmatpush2.msra.mxu0 0.0
    %97 = vmatprep.subr.mxu0 0.0
    %98 = vmatpush2.msra.mxu0 0.0
    %99 = vmatprep.subr.mxu0 0.0
    %100 = vmatpush2.msra.mxu0 0.0
    %101 = vmatprep.subr.mxu0 0.0
    %102 = vmatpush2.msra.mxu0 0.0
    %103 = vmatprep.mubr.f32.mxu0 0.0
    %v104 = vand.u32 %v36, 4294901760
    %v105 = vsub.f32 %v36, %v104
    %v106 = vand.u32 %v105, 4294901760
    %v107 = vsub.f32 %v105, %v106
    %v108 = vand.u32 %v107, 4294901760
    %109 = vmatmul.mubr.f32.gmra.mxu0 %v108
    %v110 = vpop.f32.mrf.mxu0
    %v111 = vadd.f32 0.0, %v110
    %v112 = vpop.f32.mrf.mxu0
    %113 = vdwg.mxu0
    %114 = vmatprep.subr.mxu0 0.0
    %115 = vmatpush1.msra.mxu0 0.0
    %116 = vmatprep.subr.mxu0 0.0
    %117 = vmatpush1.msra.mxu0 0.0
    %118 = vmatprep.subr.mxu0 0.0
    %119 = vmatpush1.msra.mxu0 0.0
    %120 = vmatprep.subr.mxu0 0.0
    %121 = vmatpush1.msra.mxu0 0.0
    %122 = vmatprep.subr.mxu0 0.0
    %123 = vmatpush1.msra.mxu0 0.0
    %124 = vmatprep.subr.mxu0 0.0
    %125 = vmatpush1.msra.mxu0 0.0
    %126 = vmatprep.subr.mxu0 0.0
    %127 = vmatpush1.msra.mxu0 0.0
    %128 = vmatprep.subr.mxu0 0.0
    %129 = vmatpush1.msra.mxu0 0.0
    %130 = vmatprep.subr.mxu0 0.0
    %131 = vmatpush1.msra.mxu0 0.0
    %132 = vmatprep.subr.mxu0 0.0
    %133 = vmatpush1.msra.mxu0 0.0
    %134 = vmatprep.subr.mxu0 0.0
    %135 = vmatpush1.msra.mxu0 0.0
    %136 = vmatprep.subr.mxu0 0.0
    %137 = vmatpush1.msra.mxu0 0.0
    %138 = vmatprep.subr.mxu0 0.0
    %139 = vmatpush1.msra.mxu0 0.0
    %140 = vmatprep.subr.mxu0 0.0
    %141 = vmatpush1.msra.mxu0 0.0
    %142 = vmatprep.subr.mxu0 0.0
    %143 = vmatpush1.msra.mxu0 0.0
    %144 = vmatprep.subr.mxu0 0.0
    %v145 = vand.u32 %v32, 4294901760
    %v146 = vsub.f32 %v32, %v145
    %v147 = vand.u32 %v146, 4294901760
    %v148 = vsub.f32 %v146, %v147
    %v149 = vand.u32 %v148, 4294901760
    %150 = vmatpush1.msra.mxu0 %v149
    %151 = vmatprep.subr.mxu0 0.0
    %152 = vmatpush2.msra.mxu0 0.0
    %153 = vmatprep.subr.mxu0 0.0
    %154 = vmatpush2.msra.mxu0 0.0
    %155 = vmatprep.subr.mxu0 0.0
    %156 = vmatpush2.msra.mxu0 0.0
    %157 = vmatprep.subr.mxu0 0.0
    %158 = vmatpush2.msra.mxu0 0.0
    %159 = vmatprep.subr.mxu0 0.0
    %160 = vmatpush2.msra.mxu0 0.0
    %161 = vmatprep.subr.mxu0 0.0
    %162 = vmatpush2.msra.mxu0 0.0
    %163 = vmatprep.subr.mxu0 0.0
    %164 = vmatpush2.msra.mxu0 0.0
    %165 = vmatprep.subr.mxu0 0.0
    %166 = vmatpush2.msra.mxu0 0.0
    %167 = vmatprep.subr.mxu0 0.0
    %168 = vmatpush2.msra.mxu0 0.0
    %169 = vmatprep.subr.mxu0 0.0
    %170 = vmatpush2.msra.mxu0 0.0
    %171 = vmatprep.subr.mxu0 0.0
    %172 = vmatpush2.msra.mxu0 0.0
    %173 = vmatprep.subr.mxu0 0.0
    %174 = vmatpush2.msra.mxu0 0.0
    %175 = vmatprep.subr.mxu0 0.0
    %176 = vmatpush2.msra.mxu0 0.0
    %177 = vmatprep.subr.mxu0 0.0
    %178 = vmatpush2.msra.mxu0 0.0
    %179 = vmatprep.subr.mxu0 0.0
    %180 = vmatpush2.msra.mxu0 0.0
    %181 = vmatprep.subr.mxu0 0.0
    %182 = vmatpush2.msra.mxu0 0.0
    %183 = vmatprep.mubr.f32.mxu0 0.0
    %v184 = vand.u32 %v36, 4294901760
    %185 = vmatmul.mubr.f32.gmra.mxu0 %v184
    %v186 = vpop.f32.mrf.mxu0
    %v187 = vadd.f32 %v111, %v186
    %v188 = vpop.f32.mrf.mxu0
    %189 = vdwg.mxu0
    %190 = vmatprep.subr.mxu0 0.0
    %191 = vmatpush1.msra.mxu0 0.0
    %192 = vmatprep.subr.mxu0 0.0
    %193 = vmatpush1.msra.mxu0 0.0
    %194 = vmatprep.subr.mxu0 0.0
    %195 = vmatpush1.msra.mxu0 0.0
    %196 = vmatprep.subr.mxu0 0.0
    %197 = vmatpush1.msra.mxu0 0.0
    %198 = vmatprep.subr.mxu0 0.0
    %199 = vmatpush1.msra.mxu0 0.0
    %200 = vmatprep.subr.mxu0 0.0
    %201 = vmatpush1.msra.mxu0 0.0
    %202 = vmatprep.subr.mxu0 0.0
    %203 = vmatpush1.msra.mxu0 0.0
    %204 = vmatprep.subr.mxu0 0.0
    %205 = vmatpush1.msra.mxu0 0.0
    %206 = vmatprep.subr.mxu0 0.0
    %207 = vmatpush1.msra.mxu0 0.0
    %208 = vmatprep.subr.mxu0 0.0
    %209 = vmatpush1.msra.mxu0 0.0
    %210 = vmatprep.subr.mxu0 0.0
    %211 = vmatpush1.msra.mxu0 0.0
    %212 = vmatprep.subr.mxu0 0.0
    %213 = vmatpush1.msra.mxu0 0.0
    %214 = vmatprep.subr.mxu0 0.0
    %215 = vmatpush1.msra.mxu0 0.0
    %216 = vmatprep.subr.mxu0 0.0
    %217 = vmatpush1.msra.mxu0 0.0
    %218 = vmatprep.subr.mxu0 0.0
    %219 = vmatpush1.msra.mxu0 0.0
    %220 = vmatprep.subr.mxu0 0.0
    %v221 = vand.u32 %v32, 4294901760
    %v222 = vsub.f32 %v32, %v221
    %223 = vmatpush1.msra.mxu0 %v222
    %224 = vmatprep.subr.mxu0 0.0
    %225 = vmatpush2.msra.mxu0 0.0
    %226 = vmatprep.subr.mxu0 0.0
    %227 = vmatpush2.msra.mxu0 0.0
    %228 = vmatprep.subr.mxu0 0.0
    %229 = vmatpush2.msra.mxu0 0.0
    %230 = vmatprep.subr.mxu0 0.0
    %231 = vmatpush2.msra.mxu0 0.0
    %232 = vmatprep.subr.mxu0 0.0
    %233 = vmatpush2.msra.mxu0 0.0
    %234 = vmatprep.subr.mxu0 0.0
    %235 = vmatpush2.msra.mxu0 0.0
    %236 = vmatprep.subr.mxu0 0.0
    %237 = vmatpush2.msra.mxu0 0.0
    %238 = vmatprep.subr.mxu0 0.0
    %239 = vmatpush2.msra.mxu0 0.0
    %240 = vmatprep.subr.mxu0 0.0
    %241 = vmatpush2.msra.mxu0 0.0
    %242 = vmatprep.subr.mxu0 0.0
    %243 = vmatpush2.msra.mxu0 0.0
    %244 = vmatprep.subr.mxu0 0.0
    %245 = vmatpush2.msra.mxu0 0.0
    %246 = vmatprep.subr.mxu0 0.0
    %247 = vmatpush2.msra.mxu0 0.0
    %248 = vmatprep.subr.mxu0 0.0
    %249 = vmatpush2.msra.mxu0 0.0
    %250 = vmatprep.subr.mxu0 0.0
    %251 = vmatpush2.msra.mxu0 0.0
    %252 = vmatprep.subr.mxu0 0.0
    %253 = vmatpush2.msra.mxu0 0.0
    %254 = vmatprep.subr.mxu0 0.0
    %255 = vmatpush2.msra.mxu0 0.0
    %256 = vmatprep.mubr.f32.mxu0 0.0
    %v257 = vand.u32 %v36, 4294901760
    %v258 = vsub.f32 %v36, %v257
    %259 = vmatmul.mubr.f32.gmra.mxu0 %v258
    %v260 = vpop.f32.mrf.mxu0
    %v261 = vadd.f32 %v187, %v260
    %v262 = vpop.f32.mrf.mxu0
    %263 = vdwg.mxu0
    %264 = vmatprep.subr.mxu0 0.0
    %265 = vmatpush1.msra.mxu0 0.0
    %266 = vmatprep.subr.mxu0 0.0
    %267 = vmatpush1.msra.mxu0 0.0
    %268 = vmatprep.subr.mxu0 0.0
    %269 = vmatpush1.msra.mxu0 0.0
    %270 = vmatprep.subr.mxu0 0.0
    %271 = vmatpush1.msra.mxu0 0.0
    %272 = vmatprep.subr.mxu0 0.0
    %273 = vmatpush1.msra.mxu0 0.0
    %274 = vmatprep.subr.mxu0 0.0
    %275 = vmatpush1.msra.mxu0 0.0
    %276 = vmatprep.subr.mxu0 0.0
    %277 = vmatpush1.msra.mxu0 0.0
    %278 = vmatprep.subr.mxu0 0.0
    %279 = vmatpush1.msra.mxu0 0.0
    %280 = vmatprep.subr.mxu0 0.0
    %281 = vmatpush1.msra.mxu0 0.0
    %282 = vmatprep.subr.mxu0 0.0
    %283 = vmatpush1.msra.mxu0 0.0
    %284 = vmatprep.subr.mxu0 0.0
    %285 = vmatpush1.msra.mxu0 0.0
    %286 = vmatprep.subr.mxu0 0.0
    %287 = vmatpush1.msra.mxu0 0.0
    %288 = vmatprep.subr.mxu0 0.0
    %289 = vmatpush1.msra.mxu0 0.0
    %290 = vmatprep.subr.mxu0 0.0
    %291 = vmatpush1.msra.mxu0 0.0
    %292 = vmatprep.subr.mxu0 0.0
    %293 = vmatpush1.msra.mxu0 0.0
    %294 = vmatprep.subr.mxu0 0.0
    %v295 = vand.u32 %v32, 4294901760
    %296 = vmatpush1.msra.mxu0 %v295
    %297 = vmatprep.subr.mxu0 0.0
    %298 = vmatpush2.msra.mxu0 0.0
    %299 = vmatprep.subr.mxu0 0.0
    %300 = vmatpush2.msra.mxu0 0.0
    %301 = vmatprep.subr.mxu0 0.0
    %302 = vmatpush2.msra.mxu0 0.0
    %303 = vmatprep.subr.mxu0 0.0
    %304 = vmatpush2.msra.mxu0 0.0
    %305 = vmatprep.subr.mxu0 0.0
    %306 = vmatpush2.msra.mxu0 0.0
    %307 = vmatprep.subr.mxu0 0.0
    %308 = vmatpush2.msra.mxu0 0.0
    %309 = vmatprep.subr.mxu0 0.0
    %310 = vmatpush2.msra.mxu0 0.0
    %311 = vmatprep.subr.mxu0 0.0
    %312 = vmatpush2.msra.mxu0 0.0
    %313 = vmatprep.subr.mxu0 0.0
    %314 = vmatpush2.msra.mxu0 0.0
    %315 = vmatprep.subr.mxu0 0.0
    %316 = vmatpush2.msra.mxu0 0.0
    %317 = vmatprep.subr.mxu0 0.0
    %318 = vmatpush2.msra.mxu0 0.0
    %319 = vmatprep.subr.mxu0 0.0
    %320 = vmatpush2.msra.mxu0 0.0
    %321 = vmatprep.subr.mxu0 0.0
    %322 = vmatpush2.msra.mxu0 0.0
    %323 = vmatprep.subr.mxu0 0.0
    %324 = vmatpush2.msra.mxu0 0.0
    %325 = vmatprep.subr.mxu0 0.0
    %326 = vmatpush2.msra.mxu0 0.0
    %327 = vmatprep.subr.mxu0 0.0
    %328 = vmatpush2.msra.mxu0 0.0
    %329 = vmatprep.mubr.f32.mxu0 0.0
    %v330 = vand.u32 %v36, 4294901760
    %v331 = vsub.f32 %v36, %v330
    %v332 = vand.u32 %v331, 4294901760
    %333 = vmatmul.mubr.f32.gmra.mxu0 %v332
    %v334 = vpop.f32.mrf.mxu0
    %v335 = vadd.f32 %v261, %v334
    %v336 = vpop.f32.mrf.mxu0
    %337 = vdwg.mxu0
    %338 = vmatprep.subr.mxu0 0.0
    %339 = vmatpush1.msra.mxu0 0.0
    %340 = vmatprep.subr.mxu0 0.0
    %341 = vmatpush1.msra.mxu0 0.0
    %342 = vmatprep.subr.mxu0 0.0
    %343 = vmatpush1.msra.mxu0 0.0
    %344 = vmatprep.subr.mxu0 0.0
    %345 = vmatpush1.msra.mxu0 0.0
    %346 = vmatprep.subr.mxu0 0.0
    %347 = vmatpush1.msra.mxu0 0.0
    %348 = vmatprep.subr.mxu0 0.0
    %349 = vmatpush1.msra.mxu0 0.0
    %350 = vmatprep.subr.mxu0 0.0
    %351 = vmatpush1.msra.mxu0 0.0
    %352 = vmatprep.subr.mxu0 0.0
    %353 = vmatpush1.msra.mxu0 0.0
    %354 = vmatprep.subr.mxu0 0.0
    %355 = vmatpush1.msra.mxu0 0.0
    %356 = vmatprep.subr.mxu0 0.0
    %357 = vmatpush1.msra.mxu0 0.0
    %358 = vmatprep.subr.mxu0 0.0
    %359 = vmatpush1.msra.mxu0 0.0
    %360 = vmatprep.subr.mxu0 0.0
    %361 = vmatpush1.msra.mxu0 0.0
    %362 = vmatprep.subr.mxu0 0.0
    %363 = vmatpush1.msra.mxu0 0.0
    %364 = vmatprep.subr.mxu0 0.0
    %365 = vmatpush1.msra.mxu0 0.0
    %366 = vmatprep.subr.mxu0 0.0
    %367 = vmatpush1.msra.mxu0 0.0
    %368 = vmatprep.subr.mxu0 0.0
    %v369 = vand.u32 %v32, 4294901760
    %v370 = vsub.f32 %v32, %v369
    %v371 = vand.u32 %v370, 4294901760
    %372 = vmatpush1.msra.mxu0 %v371
    %373 = vmatprep.subr.mxu0 0.0
    %374 = vmatpush2.msra.mxu0 0.0
    %375 = vmatprep.subr.mxu0 0.0
    %376 = vmatpush2.msra.mxu0 0.0
    %377 = vmatprep.subr.mxu0 0.0
    %378 = vmatpush2.msra.mxu0 0.0
    %379 = vmatprep.subr.mxu0 0.0
    %380 = vmatpush2.msra.mxu0 0.0
    %381 = vmatprep.subr.mxu0 0.0
    %382 = vmatpush2.msra.mxu0 0.0
    %383 = vmatprep.subr.mxu0 0.0
    %384 = vmatpush2.msra.mxu0 0.0
    %385 = vmatprep.subr.mxu0 0.0
    %386 = vmatpush2.msra.mxu0 0.0
    %387 = vmatprep.subr.mxu0 0.0
    %388 = vmatpush2.msra.mxu0 0.0
    %389 = vmatprep.subr.mxu0 0.0
    %390 = vmatpush2.msra.mxu0 0.0
    %391 = vmatprep.subr.mxu0 0.0
    %392 = vmatpush2.msra.mxu0 0.0
    %393 = vmatprep.subr.mxu0 0.0
    %394 = vmatpush2.msra.mxu0 0.0
    %395 = vmatprep.subr.mxu0 0.0
    %396 = vmatpush2.msra.mxu0 0.0
    %397 = vmatprep.subr.mxu0 0.0
    %398 = vmatpush2.msra.mxu0 0.0
    %399 = vmatprep.subr.mxu0 0.0
    %400 = vmatpush2.msra.mxu0 0.0
    %401 = vmatprep.subr.mxu0 0.0
    %402 = vmatpush2.msra.mxu0 0.0
    %403 = vmatprep.subr.mxu0 0.0
    %404 = vmatpush2.msra.mxu0 0.0
    %405 = vmatprep.mubr.f32.mxu0 0.0
    %v406 = vand.u32 %v36, 4294901760
    %407 = vmatmul.mubr.f32.gmra.mxu0 %v406
    %v408 = vpop.f32.mrf.mxu0
    %v409 = vadd.f32 %v335, %v408
    %v410 = vpop.f32.mrf.mxu0
    %411 = vdwg.mxu0
    %412 = vmatprep.subr.mxu0 0.0
    %413 = vmatpush1.msra.mxu0 0.0
    %414 = vmatprep.subr.mxu0 0.0
    %415 = vmatpush1.msra.mxu0 0.0
    %416 = vmatprep.subr.mxu0 0.0
    %417 = vmatpush1.msra.mxu0 0.0
    %418 = vmatprep.subr.mxu0 0.0
    %419 = vmatpush1.msra.mxu0 0.0
    %420 = vmatprep.subr.mxu0 0.0
    %421 = vmatpush1.msra.mxu0 0.0
    %422 = vmatprep.subr.mxu0 0.0
    %423 = vmatpush1.msra.mxu0 0.0
    %424 = vmatprep.subr.mxu0 0.0
    %425 = vmatpush1.msra.mxu0 0.0
    %426 = vmatprep.subr.mxu0 0.0
    %427 = vmatpush1.msra.mxu0 0.0
    %428 = vmatprep.subr.mxu0 0.0
    %429 = vmatpush1.msra.mxu0 0.0
    %430 = vmatprep.subr.mxu0 0.0
    %431 = vmatpush1.msra.mxu0 0.0
    %432 = vmatprep.subr.mxu0 0.0
    %433 = vmatpush1.msra.mxu0 0.0
    %434 = vmatprep.subr.mxu0 0.0
    %435 = vmatpush1.msra.mxu0 0.0
    %436 = vmatprep.subr.mxu0 0.0
    %437 = vmatpush1.msra.mxu0 0.0
    %438 = vmatprep.subr.mxu0 0.0
    %439 = vmatpush1.msra.mxu0 0.0
    %440 = vmatprep.subr.mxu0 0.0
    %441 = vmatpush1.msra.mxu0 0.0
    %442 = vmatprep.subr.mxu0 0.0
    %v443 = vand.u32 %v32, 4294901760
    %444 = vmatpush1.msra.mxu0 %v443
    %445 = vmatprep.subr.mxu0 0.0
    %446 = vmatpush2.msra.mxu0 0.0
    %447 = vmatprep.subr.mxu0 0.0
    %448 = vmatpush2.msra.mxu0 0.0
    %449 = vmatprep.subr.mxu0 0.0
    %450 = vmatpush2.msra.mxu0 0.0
    %451 = vmatprep.subr.mxu0 0.0
    %452 = vmatpush2.msra.mxu0 0.0
    %453 = vmatprep.subr.mxu0 0.0
    %454 = vmatpush2.msra.mxu0 0.0
    %455 = vmatprep.subr.mxu0 0.0
    %456 = vmatpush2.msra.mxu0 0.0
    %457 = vmatprep.subr.mxu0 0.0
    %458 = vmatpush2.msra.mxu0 0.0
    %459 = vmatprep.subr.mxu0 0.0
    %460 = vmatpush2.msra.mxu0 0.0
    %461 = vmatprep.subr.mxu0 0.0
    %462 = vmatpush2.msra.mxu0 0.0
    %463 = vmatprep.subr.mxu0 0.0
    %464 = vmatpush2.msra.mxu0 0.0
    %465 = vmatprep.subr.mxu0 0.0
    %466 = vmatpush2.msra.mxu0 0.0
    %467 = vmatprep.subr.mxu0 0.0
    %468 = vmatpush2.msra.mxu0 0.0
    %469 = vmatprep.subr.mxu0 0.0
    %470 = vmatpush2.msra.mxu0 0.0
    %471 = vmatprep.subr.mxu0 0.0
    %472 = vmatpush2.msra.mxu0 0.0
    %473 = vmatprep.subr.mxu0 0.0
    %474 = vmatpush2.msra.mxu0 0.0
    %475 = vmatprep.subr.mxu0 0.0
    %476 = vmatpush2.msra.mxu0 0.0
    %477 = vmatprep.mubr.f32.mxu0 0.0
    %v478 = vand.u32 %v36, 4294901760
    %479 = vmatmul.mubr.f32.gmra.mxu0 %v478
    %v480 = vpop.f32.mrf.mxu0
    %v481 = vadd.f32 %v409, %v480
    %v482 = vpop.f32.mrf.mxu0
    %483 = vdwg.mxu0
    %vm484 = vcmask 31744
    %v486 = vsel %vm484, %v29, 0
    %vm488 = vcmask 1043456
    %v490 = vsel %vm488, %v31, 0
    %492 = vmatprep.subr.mxu0 0.0
    %493 = vmatpush1.msra.mxu0 0.0
    %494 = vmatprep.subr.mxu0 0.0
    %495 = vmatpush1.msra.mxu0 0.0
    %496 = vmatprep.subr.mxu0 0.0
    %497 = vmatpush1.msra.mxu0 0.0
    %498 = vmatprep.subr.mxu0 0.0
    %499 = vmatpush1.msra.mxu0 0.0
    %500 = vmatprep.subr.mxu0 0.0
    %501 = vmatpush1.msra.mxu0 0.0
    %502 = vmatprep.subr.mxu0 0.0
    %503 = vmatpush1.msra.mxu0 0.0
    %504 = vmatprep.subr.mxu0 0.0
    %505 = vmatpush1.msra.mxu0 0.0
    %506 = vmatprep.subr.mxu0 0.0
    %507 = vmatpush1.msra.mxu0 0.0
    %508 = vmatprep.subr.mxu0 0.0
    %509 = vmatpush1.msra.mxu0 0.0
    %510 = vmatprep.subr.mxu0 0.0
    %511 = vmatpush1.msra.mxu0 0.0
    %512 = vmatprep.subr.mxu0 0.0
    %513 = vmatpush1.msra.mxu0 0.0
    %514 = vmatprep.subr.mxu0 0.0
    %515 = vmatpush1.msra.mxu0 0.0
    %516 = vmatprep.subr.mxu0 0.0
    %517 = vmatpush1.msra.mxu0 0.0
    %518 = vmatprep.subr.mxu0 0.0
    %519 = vmatpush1.msra.mxu0 0.0
    %520 = vmatprep.subr.mxu0 0.0
    %521 = vmatpush1.msra.mxu0 0.0
    %522 = vmatprep.subr.mxu0 0.0
    %v523 = vand.u32 %v490, 4294901760
    %524 = vmatpush1.msra.mxu0 %v523
    %525 = vmatprep.subr.mxu0 0.0
    %526 = vmatpush2.msra.mxu0 0.0
    %527 = vmatprep.subr.mxu0 0.0
    %528 = vmatpush2.msra.mxu0 0.0
    %529 = vmatprep.subr.mxu0 0.0
    %530 = vmatpush2.msra.mxu0 0.0
    %531 = vmatprep.subr.mxu0 0.0
    %532 = vmatpush2.msra.mxu0 0.0
    %533 = vmatprep.subr.mxu0 0.0
    %534 = vmatpush2.msra.mxu0 0.0
    %535 = vmatprep.subr.mxu0 0.0
    %536 = vmatpush2.msra.mxu0 0.0
    %537 = vmatprep.subr.mxu0 0.0
    %538 = vmatpush2.msra.mxu0 0.0
    %539 = vmatprep.subr.mxu0 0.0
    %540 = vmatpush2.msra.mxu0 0.0
    %541 = vmatprep.subr.mxu0 0.0
    %542 = vmatpush2.msra.mxu0 0.0
    %543 = vmatprep.subr.mxu0 0.0
    %544 = vmatpush2.msra.mxu0 0.0
    %545 = vmatprep.subr.mxu0 0.0
    %546 = vmatpush2.msra.mxu0 0.0
    %547 = vmatprep.subr.mxu0 0.0
    %548 = vmatpush2.msra.mxu0 0.0
    %549 = vmatprep.subr.mxu0 0.0
    %550 = vmatpush2.msra.mxu0 0.0
    %551 = vmatprep.subr.mxu0 0.0
    %552 = vmatpush2.msra.mxu0 0.0
    %553 = vmatprep.subr.mxu0 0.0
    %554 = vmatpush2.msra.mxu0 0.0
    %555 = vmatprep.subr.mxu0 0.0
    %556 = vmatpush2.msra.mxu0 0.0
    %557 = vmatprep.mubr.f32.mxu0 0.0
    %v558 = vand.u32 %v486, 4294901760
    %v559 = vsub.f32 %v486, %v558
    %v560 = vand.u32 %v559, 4294901760
    %v561 = vsub.f32 %v559, %v560
    %v562 = vand.u32 %v561, 4294901760
    %563 = vmatmul.mubr.f32.gmra.mxu0 %v562
    %v564 = vpop.f32.mrf.mxu0
    %v565 = vadd.f32 %v481, %v564
    %v566 = vpop.f32.mrf.mxu0
    %567 = vdwg.mxu0
    %568 = vmatprep.subr.mxu0 0.0
    %569 = vmatpush1.msra.mxu0 0.0
    %570 = vmatprep.subr.mxu0 0.0
    %571 = vmatpush1.msra.mxu0 0.0
    %572 = vmatprep.subr.mxu0 0.0
    %573 = vmatpush1.msra.mxu0 0.0
    %574 = vmatprep.subr.mxu0 0.0
    %575 = vmatpush1.msra.mxu0 0.0
    %576 = vmatprep.subr.mxu0 0.0
    %577 = vmatpush1.msra.mxu0 0.0
    %578 = vmatprep.subr.mxu0 0.0
    %579 = vmatpush1.msra.mxu0 0.0
    %580 = vmatprep.subr.mxu0 0.0
    %581 = vmatpush1.msra.mxu0 0.0
    %582 = vmatprep.subr.mxu0 0.0
    %583 = vmatpush1.msra.mxu0 0.0
    %584 = vmatprep.subr.mxu0 0.0
    %585 = vmatpush1.msra.mxu0 0.0
    %586 = vmatprep.subr.mxu0 0.0
    %587 = vmatpush1.msra.mxu0 0.0
    %588 = vmatprep.subr.mxu0 0.0
    %589 = vmatpush1.msra.mxu0 0.0
    %590 = vmatprep.subr.mxu0 0.0
    %591 = vmatpush1.msra.mxu0 0.0
    %592 = vmatprep.subr.mxu0 0.0
    %593 = vmatpush1.msra.mxu0 0.0
    %594 = vmatprep.subr.mxu0 0.0
    %595 = vmatpush1.msra.mxu0 0.0
    %596 = vmatprep.subr.mxu0 0.0
    %597 = vmatpush1.msra.mxu0 0.0
    %598 = vmatprep.subr.mxu0 0.0
    %v599 = vand.u32 %v490, 4294901760
    %v600 = vsub.f32 %v490, %v599
    %v601 = vand.u32 %v600, 4294901760
    %v602 = vsub.f32 %v600, %v601
    %v603 = vand.u32 %v602, 4294901760
    %604 = vmatpush1.msra.mxu0 %v603
    %605 = vmatprep.subr.mxu0 0.0
    %606 = vmatpush2.msra.mxu0 0.0
    %607 = vmatprep.subr.mxu0 0.0
    %608 = vmatpush2.msra.mxu0 0.0
    %609 = vmatprep.subr.mxu0 0.0
    %610 = vmatpush2.msra.mxu0 0.0
    %611 = vmatprep.subr.mxu0 0.0
    %612 = vmatpush2.msra.mxu0 0.0
    %613 = vmatprep.subr.mxu0 0.0
    %614 = vmatpush2.msra.mxu0 0.0
    %615 = vmatprep.subr.mxu0 0.0
    %616 = vmatpush2.msra.mxu0 0.0
    %617 = vmatprep.subr.mxu0 0.0
    %618 = vmatpush2.msra.mxu0 0.0
    %619 = vmatprep.subr.mxu0 0.0
    %620 = vmatpush2.msra.mxu0 0.0
    %621 = vmatprep.subr.mxu0 0.0
    %622 = vmatpush2.msra.mxu0 0.0
    %623 = vmatprep.subr.mxu0 0.0
    %624 = vmatpush2.msra.mxu0 0.0
    %625 = vmatprep.subr.mxu0 0.0
    %626 = vmatpush2.msra.mxu0 0.0
    %627 = vmatprep.subr.mxu0 0.0
    %628 = vmatpush2.msra.mxu0 0.0
    %629 = vmatprep.subr.mxu0 0.0
    %630 = vmatpush2.msra.mxu0 0.0
    %631 = vmatprep.subr.mxu0 0.0
    %632 = vmatpush2.msra.mxu0 0.0
    %633 = vmatprep.subr.mxu0 0.0
    %634 = vmatpush2.msra.mxu0 0.0
    %635 = vmatprep.subr.mxu0 0.0
    %636 = vmatpush2.msra.mxu0 0.0
    %637 = vmatprep.mubr.f32.mxu0 0.0
    %v638 = vand.u32 %v486, 4294901760
    %639 = vmatmul.mubr.f32.gmra.mxu0 %v638
    %v640 = vpop.f32.mrf.mxu0
    %v641 = vadd.f32 %v565, %v640
    %v642 = vpop.f32.mrf.mxu0
    %643 = vdwg.mxu0
    %644 = vmatprep.subr.mxu0 0.0
    %645 = vmatpush1.msra.mxu0 0.0
    %646 = vmatprep.subr.mxu0 0.0
    %647 = vmatpush1.msra.mxu0 0.0
    %648 = vmatprep.subr.mxu0 0.0
    %649 = vmatpush1.msra.mxu0 0.0
    %650 = vmatprep.subr.mxu0 0.0
    %651 = vmatpush1.msra.mxu0 0.0
    %652 = vmatprep.subr.mxu0 0.0
    %653 = vmatpush1.msra.mxu0 0.0
    %654 = vmatprep.subr.mxu0 0.0
    %655 = vmatpush1.msra.mxu0 0.0
    %656 = vmatprep.subr.mxu0 0.0
    %657 = vmatpush1.msra.mxu0 0.0
    %658 = vmatprep.subr.mxu0 0.0
    %659 = vmatpush1.msra.mxu0 0.0
    %660 = vmatprep.subr.mxu0 0.0
    %661 = vmatpush1.msra.mxu0 0.0
    %662 = vmatprep.subr.mxu0 0.0
    %663 = vmatpush1.msra.mxu0 0.0
    %664 = vmatprep.subr.mxu0 0.0
    %665 = vmatpush1.msra.mxu0 0.0
    %666 = vmatprep.subr.mxu0 0.0
    %667 = vmatpush1.msra.mxu0 0.0
    %668 = vmatprep.subr.mxu0 0.0
    %669 = vmatpush1.msra.mxu0 0.0
    %670 = vmatprep.subr.mxu0 0.0
    %671 = vmatpush1.msra.mxu0 0.0
    %672 = vmatprep.subr.mxu0 0.0
    %673 = vmatpush1.msra.mxu0 0.0
    %674 = vmatprep.subr.mxu0 0.0
    %v675 = vand.u32 %v490, 4294901760
    %v676 = vsub.f32 %v490, %v675
    %677 = vmatpush1.msra.mxu0 %v676
    %678 = vmatprep.subr.mxu0 0.0
    %679 = vmatpush2.msra.mxu0 0.0
    %680 = vmatprep.subr.mxu0 0.0
    %681 = vmatpush2.msra.mxu0 0.0
    %682 = vmatprep.subr.mxu0 0.0
    %683 = vmatpush2.msra.mxu0 0.0
    %684 = vmatprep.subr.mxu0 0.0
    %685 = vmatpush2.msra.mxu0 0.0
    %686 = vmatprep.subr.mxu0 0.0
    %687 = vmatpush2.msra.mxu0 0.0
    %688 = vmatprep.subr.mxu0 0.0
    %689 = vmatpush2.msra.mxu0 0.0
    %690 = vmatprep.subr.mxu0 0.0
    %691 = vmatpush2.msra.mxu0 0.0
    %692 = vmatprep.subr.mxu0 0.0
    %693 = vmatpush2.msra.mxu0 0.0
    %694 = vmatprep.subr.mxu0 0.0
    %695 = vmatpush2.msra.mxu0 0.0
    %696 = vmatprep.subr.mxu0 0.0
    %697 = vmatpush2.msra.mxu0 0.0
    %698 = vmatprep.subr.mxu0 0.0
    %699 = vmatpush2.msra.mxu0 0.0
    %700 = vmatprep.subr.mxu0 0.0
    %701 = vmatpush2.msra.mxu0 0.0
    %702 = vmatprep.subr.mxu0 0.0
    %703 = vmatpush2.msra.mxu0 0.0
    %704 = vmatprep.subr.mxu0 0.0
    %705 = vmatpush2.msra.mxu0 0.0
    %706 = vmatprep.subr.mxu0 0.0
    %707 = vmatpush2.msra.mxu0 0.0
    %708 = vmatprep.subr.mxu0 0.0
    %709 = vmatpush2.msra.mxu0 0.0
    %710 = vmatprep.mubr.f32.mxu0 0.0
    %v711 = vand.u32 %v486, 4294901760
    %v712 = vsub.f32 %v486, %v711
    %713 = vmatmul.mubr.f32.gmra.mxu0 %v712
    %v714 = vpop.f32.mrf.mxu0
    %v715 = vadd.f32 %v641, %v714
    %v716 = vpop.f32.mrf.mxu0
    %717 = vdwg.mxu0
    %718 = vmatprep.subr.mxu0 0.0
    %719 = vmatpush1.msra.mxu0 0.0
    %720 = vmatprep.subr.mxu0 0.0
    %721 = vmatpush1.msra.mxu0 0.0
    %722 = vmatprep.subr.mxu0 0.0
    %723 = vmatpush1.msra.mxu0 0.0
    %724 = vmatprep.subr.mxu0 0.0
    %725 = vmatpush1.msra.mxu0 0.0
    %726 = vmatprep.subr.mxu0 0.0
    %727 = vmatpush1.msra.mxu0 0.0
    %728 = vmatprep.subr.mxu0 0.0
    %729 = vmatpush1.msra.mxu0 0.0
    %730 = vmatprep.subr.mxu0 0.0
    %731 = vmatpush1.msra.mxu0 0.0
    %732 = vmatprep.subr.mxu0 0.0
    %733 = vmatpush1.msra.mxu0 0.0
    %734 = vmatprep.subr.mxu0 0.0
    %735 = vmatpush1.msra.mxu0 0.0
    %736 = vmatprep.subr.mxu0 0.0
    %737 = vmatpush1.msra.mxu0 0.0
    %738 = vmatprep.subr.mxu0 0.0
    %739 = vmatpush1.msra.mxu0 0.0
    %740 = vmatprep.subr.mxu0 0.0
    %741 = vmatpush1.msra.mxu0 0.0
    %742 = vmatprep.subr.mxu0 0.0
    %743 = vmatpush1.msra.mxu0 0.0
    %744 = vmatprep.subr.mxu0 0.0
    %745 = vmatpush1.msra.mxu0 0.0
    %746 = vmatprep.subr.mxu0 0.0
    %747 = vmatpush1.msra.mxu0 0.0
    %748 = vmatprep.subr.mxu0 0.0
    %v749 = vand.u32 %v490, 4294901760
    %750 = vmatpush1.msra.mxu0 %v749
    %751 = vmatprep.subr.mxu0 0.0
    %752 = vmatpush2.msra.mxu0 0.0
    %753 = vmatprep.subr.mxu0 0.0
    %754 = vmatpush2.msra.mxu0 0.0
    %755 = vmatprep.subr.mxu0 0.0
    %756 = vmatpush2.msra.mxu0 0.0
    %757 = vmatprep.subr.mxu0 0.0
    %758 = vmatpush2.msra.mxu0 0.0
    %759 = vmatprep.subr.mxu0 0.0
    %760 = vmatpush2.msra.mxu0 0.0
    %761 = vmatprep.subr.mxu0 0.0
    %762 = vmatpush2.msra.mxu0 0.0
    %763 = vmatprep.subr.mxu0 0.0
    %764 = vmatpush2.msra.mxu0 0.0
    %765 = vmatprep.subr.mxu0 0.0
    %766 = vmatpush2.msra.mxu0 0.0
    %767 = vmatprep.subr.mxu0 0.0
    %768 = vmatpush2.msra.mxu0 0.0
    %769 = vmatprep.subr.mxu0 0.0
    %770 = vmatpush2.msra.mxu0 0.0
    %771 = vmatprep.subr.mxu0 0.0
    %772 = vmatpush2.msra.mxu0 0.0
    %773 = vmatprep.subr.mxu0 0.0
    %774 = vmatpush2.msra.mxu0 0.0
    %775 = vmatprep.subr.mxu0 0.0
    %776 = vmatpush2.msra.mxu0 0.0
    %777 = vmatprep.subr.mxu0 0.0
    %778 = vmatpush2.msra.mxu0 0.0
    %779 = vmatprep.subr.mxu0 0.0
    %780 = vmatpush2.msra.mxu0 0.0
    %781 = vmatprep.subr.mxu0 0.0
    %782 = vmatpush2.msra.mxu0 0.0
    %783 = vmatprep.mubr.f32.mxu0 0.0
    %v784 = vand.u32 %v486, 4294901760
    %v785 = vsub.f32 %v486, %v784
    %v786 = vand.u32 %v785, 4294901760
    %787 = vmatmul.mubr.f32.gmra.mxu0 %v786
    %v788 = vpop.f32.mrf.mxu0
    %v789 = vadd.f32 %v715, %v788
    %v790 = vpop.f32.mrf.mxu0
    %791 = vdwg.mxu0
    %792 = vmatprep.subr.mxu0 0.0
    %793 = vmatpush1.msra.mxu0 0.0
    %794 = vmatprep.subr.mxu0 0.0
    %795 = vmatpush1.msra.mxu0 0.0
    %796 = vmatprep.subr.mxu0 0.0
    %797 = vmatpush1.msra.mxu0 0.0
    %798 = vmatprep.subr.mxu0 0.0
    %799 = vmatpush1.msra.mxu0 0.0
    %800 = vmatprep.subr.mxu0 0.0
    %801 = vmatpush1.msra.mxu0 0.0
    %802 = vmatprep.subr.mxu0 0.0
    %803 = vmatpush1.msra.mxu0 0.0
    %804 = vmatprep.subr.mxu0 0.0
    %805 = vmatpush1.msra.mxu0 0.0
    %806 = vmatprep.subr.mxu0 0.0
    %807 = vmatpush1.msra.mxu0 0.0
    %808 = vmatprep.subr.mxu0 0.0
    %809 = vmatpush1.msra.mxu0 0.0
    %810 = vmatprep.subr.mxu0 0.0
    %811 = vmatpush1.msra.mxu0 0.0
    %812 = vmatprep.subr.mxu0 0.0
    %813 = vmatpush1.msra.mxu0 0.0
    %814 = vmatprep.subr.mxu0 0.0
    %815 = vmatpush1.msra.mxu0 0.0
    %816 = vmatprep.subr.mxu0 0.0
    %817 = vmatpush1.msra.mxu0 0.0
    %818 = vmatprep.subr.mxu0 0.0
    %819 = vmatpush1.msra.mxu0 0.0
    %820 = vmatprep.subr.mxu0 0.0
    %821 = vmatpush1.msra.mxu0 0.0
    %822 = vmatprep.subr.mxu0 0.0
    %v823 = vand.u32 %v490, 4294901760
    %v824 = vsub.f32 %v490, %v823
    %v825 = vand.u32 %v824, 4294901760
    %826 = vmatpush1.msra.mxu0 %v825
    %827 = vmatprep.subr.mxu0 0.0
    %828 = vmatpush2.msra.mxu0 0.0
    %829 = vmatprep.subr.mxu0 0.0
    %830 = vmatpush2.msra.mxu0 0.0
    %831 = vmatprep.subr.mxu0 0.0
    %832 = vmatpush2.msra.mxu0 0.0
    %833 = vmatprep.subr.mxu0 0.0
    %834 = vmatpush2.msra.mxu0 0.0
    %835 = vmatprep.subr.mxu0 0.0
    %836 = vmatpush2.msra.mxu0 0.0
    %837 = vmatprep.subr.mxu0 0.0
    %838 = vmatpush2.msra.mxu0 0.0
    %839 = vmatprep.subr.mxu0 0.0
    %840 = vmatpush2.msra.mxu0 0.0
    %841 = vmatprep.subr.mxu0 0.0
    %842 = vmatpush2.msra.mxu0 0.0
    %843 = vmatprep.subr.mxu0 0.0
    %844 = vmatpush2.msra.mxu0 0.0
    %845 = vmatprep.subr.mxu0 0.0
    %846 = vmatpush2.msra.mxu0 0.0
    %847 = vmatprep.subr.mxu0 0.0
    %848 = vmatpush2.msra.mxu0 0.0
    %849 = vmatprep.subr.mxu0 0.0
    %850 = vmatpush2.msra.mxu0 0.0
    %851 = vmatprep.subr.mxu0 0.0
    %852 = vmatpush2.msra.mxu0 0.0
    %853 = vmatprep.subr.mxu0 0.0
    %854 = vmatpush2.msra.mxu0 0.0
    %855 = vmatprep.subr.mxu0 0.0
    %856 = vmatpush2.msra.mxu0 0.0
    %857 = vmatprep.subr.mxu0 0.0
    %858 = vmatpush2.msra.mxu0 0.0
    %859 = vmatprep.mubr.f32.mxu0 0.0
    %v860 = vand.u32 %v486, 4294901760
    %861 = vmatmul.mubr.f32.gmra.mxu0 %v860
    %v862 = vpop.f32.mrf.mxu0
    %v863 = vadd.f32 %v789, %v862
    %v864 = vpop.f32.mrf.mxu0
    %865 = vdwg.mxu0
    %866 = vmatprep.subr.mxu0 0.0
    %867 = vmatpush1.msra.mxu0 0.0
    %868 = vmatprep.subr.mxu0 0.0
    %869 = vmatpush1.msra.mxu0 0.0
    %870 = vmatprep.subr.mxu0 0.0
    %871 = vmatpush1.msra.mxu0 0.0
    %872 = vmatprep.subr.mxu0 0.0
    %873 = vmatpush1.msra.mxu0 0.0
    %874 = vmatprep.subr.mxu0 0.0
    %875 = vmatpush1.msra.mxu0 0.0
    %876 = vmatprep.subr.mxu0 0.0
    %877 = vmatpush1.msra.mxu0 0.0
    %878 = vmatprep.subr.mxu0 0.0
    %879 = vmatpush1.msra.mxu0 0.0
    %880 = vmatprep.subr.mxu0 0.0
    %881 = vmatpush1.msra.mxu0 0.0
    %882 = vmatprep.subr.mxu0 0.0
    %883 = vmatpush1.msra.mxu0 0.0
    %884 = vmatprep.subr.mxu0 0.0
    %885 = vmatpush1.msra.mxu0 0.0
    %886 = vmatprep.subr.mxu0 0.0
    %887 = vmatpush1.msra.mxu0 0.0
    %888 = vmatprep.subr.mxu0 0.0
    %889 = vmatpush1.msra.mxu0 0.0
    %890 = vmatprep.subr.mxu0 0.0
    %891 = vmatpush1.msra.mxu0 0.0
    %892 = vmatprep.subr.mxu0 0.0
    %893 = vmatpush1.msra.mxu0 0.0
    %894 = vmatprep.subr.mxu0 0.0
    %895 = vmatpush1.msra.mxu0 0.0
    %896 = vmatprep.subr.mxu0 0.0
    %v897 = vand.u32 %v490, 4294901760
    %898 = vmatpush1.msra.mxu0 %v897
    %899 = vmatprep.subr.mxu0 0.0
    %900 = vmatpush2.msra.mxu0 0.0
    %901 = vmatprep.subr.mxu0 0.0
    %902 = vmatpush2.msra.mxu0 0.0
    %903 = vmatprep.subr.mxu0 0.0
    %904 = vmatpush2.msra.mxu0 0.0
    %905 = vmatprep.subr.mxu0 0.0
    %906 = vmatpush2.msra.mxu0 0.0
    %907 = vmatprep.subr.mxu0 0.0
    %908 = vmatpush2.msra.mxu0 0.0
    %909 = vmatprep.subr.mxu0 0.0
    %910 = vmatpush2.msra.mxu0 0.0
    %911 = vmatprep.subr.mxu0 0.0
    %912 = vmatpush2.msra.mxu0 0.0
    %913 = vmatprep.subr.mxu0 0.0
    %914 = vmatpush2.msra.mxu0 0.0
    %915 = vmatprep.subr.mxu0 0.0
    %916 = vmatpush2.msra.mxu0 0.0
    %917 = vmatprep.subr.mxu0 0.0
    %918 = vmatpush2.msra.mxu0 0.0
    %919 = vmatprep.subr.mxu0 0.0
    %920 = vmatpush2.msra.mxu0 0.0
    %921 = vmatprep.subr.mxu0 0.0
    %922 = vmatpush2.msra.mxu0 0.0
    %923 = vmatprep.subr.mxu0 0.0
    %924 = vmatpush2.msra.mxu0 0.0
    %925 = vmatprep.subr.mxu0 0.0
    %926 = vmatpush2.msra.mxu0 0.0
    %927 = vmatprep.subr.mxu0 0.0
    %928 = vmatpush2.msra.mxu0 0.0
    %929 = vmatprep.subr.mxu0 0.0
    %930 = vmatpush2.msra.mxu0 0.0
    %931 = vmatprep.mubr.f32.mxu0 0.0
    %v932 = vand.u32 %v486, 4294901760
    %933 = vmatmul.mubr.f32.gmra.mxu0 %v932
    %v934 = vpop.f32.mrf.mxu0
    %v935 = vadd.f32 %v863, %v934
    %v936 = vpop.f32.mrf.mxu0
    %937 = vdwg.mxu0
    %v938 = vadd.f32 %v935, %v33
    %v939 = vmax.f32 %v938, 0.0
    %v940 = vld [vmem:[#allocation2 + $0x18] sm:$0xff]
    %v941 = vld [vmem:[#allocation2 + $0x20] sm:$0xff]
    %v942 = vld [vmem:[#allocation2 + $0x28] sm:$0xff]
    %v943 = vld [vmem:[#allocation2 + $0x30] sm:$0xff]
    %v944 = vld [vmem:[#allocation2 + $0x38] sm:$0xff]
    %v945 = vld [vmem:[#allocation2 + $0x40] sm:$0xff]
    %v946 = vld [vmem:[#allocation2 + $0x48] sm:$0xff]
    %v947 = vld [vmem:[#allocation2 + $0x50] sm:$0xff]
    %v948 = vld [vmem:[#allocation2 + $0x58] sm:$0xff]
    %v949 = vld [vmem:[#allocation2 + $0x60] sm:$0xff]
    %v950 = vld [vmem:[#allocation2 + $0x68] sm:$0xff]
    %v951 = vld [vmem:[#allocation2 + $0x70] sm:$0xff]
    %v952 = vld [vmem:[#allocation2 + $0x78] sm:$0xff]
    %v953 = vld [vmem:[#allocation2 + $0x80] sm:$0xff]
    %v954 = vld [vmem:[#allocation2 + $0x88] sm:$0xff]
    %v955 = vld [vmem:[#allocation2 + $0x90] sm:$0xff]
    %v956 = vld [vmem:[#allocation2 + $0x98] sm:$0xff]
    %957 = vmatprep.subr.mxu0 0.0
    %v958 = vand.u32 %v955, 4294901760
    %959 = vmatpush1.msra.mxu0 %v958
    %960 = vmatprep.subr.mxu0 0.0
    %v961 = vand.u32 %v954, 4294901760
    %962 = vmatpush1.msra.mxu0 %v961
    %963 = vmatprep.subr.mxu0 0.0
    %v964 = vand.u32 %v953, 4294901760
    %965 = vmatpush1.msra.mxu0 %v964
    %966 = vmatprep.subr.mxu0 0.0
    %v967 = vand.u32 %v952, 4294901760
    %968 = vmatpush1.msra.mxu0 %v967
    %969 = vmatprep.subr.mxu0 0.0
    %v970 = vand.u32 %v951, 4294901760
    %971 = vmatpush1.msra.mxu0 %v970
    %972 = vmatprep.subr.mxu0 0.0
    %v973 = vand.u32 %v950, 4294901760
    %974 = vmatpush1.msra.mxu0 %v973
    %975 = vmatprep.subr.mxu0 0.0
    %v976 = vand.u32 %v949, 4294901760
    %977 = vmatpush1.msra.mxu0 %v976
    %978 = vmatprep.subr.mxu0 0.0
    %v979 = vand.u32 %v948, 4294901760
    %980 = vmatpush1.msra.mxu0 %v979
    %981 = vmatprep.subr.mxu0 0.0
    %v982 = vand.u32 %v947, 4294901760
    %983 = vmatpush1.msra.mxu0 %v982
    %984 = vmatprep.subr.mxu0 0.0
    %v985 = vand.u32 %v946, 4294901760
    %986 = vmatpush1.msra.mxu0 %v985
    %987 = vmatprep.subr.mxu0 0.0
    %v988 = vand.u32 %v945, 4294901760
    %989 = vmatpush1.msra.mxu0 %v988
    %990 = vmatprep.subr.mxu0 0.0
    %v991 = vand.u32 %v944, 4294901760
    %992 = vmatpush1.msra.mxu0 %v991
    %993 = vmatprep.subr.mxu0 0.0
    %v994 = vand.u32 %v943, 4294901760
    %995 = vmatpush1.msra.mxu0 %v994
    %996 = vmatprep.subr.mxu0 0.0
    %v997 = vand.u32 %v942, 4294901760
    %998 = vmatpush1.msra.mxu0 %v997
    %999 = vmatprep.subr.mxu0 0.0
    %v1000 = vand.u32 %v941, 4294901760
    %1001 = vmatpush1.msra.mxu0 %v1000
    %1002 = vmatprep.subr.mxu0 0.0
    %v1003 = vand.u32 %v940, 4294901760
    %1004 = vmatpush1.msra.mxu0 %v1003
    %1005 = vmatprep.subr.mxu0 0.0
    %1006 = vmatpush2.msra.mxu0 0.0
    %1007 = vmatprep.subr.mxu0 0.0
    %1008 = vmatpush2.msra.mxu0 0.0
    %1009 = vmatprep.subr.mxu0 0.0
    %1010 = vmatpush2.msra.mxu0 0.0
    %1011 = vmatprep.subr.mxu0 0.0
    %1012 = vmatpush2.msra.mxu0 0.0
    %1013 = vmatprep.subr.mxu0 0.0
    %1014 = vmatpush2.msra.mxu0 0.0
    %1015 = vmatprep.subr.mxu0 0.0
    %1016 = vmatpush2.msra.mxu0 0.0
    %1017 = vmatprep.subr.mxu0 0.0
    %1018 = vmatpush2.msra.mxu0 0.0
    %1019 = vmatprep.subr.mxu0 0.0
    %1020 = vmatpush2.msra.mxu0 0.0
    %1021 = vmatprep.subr.mxu0 0.0
    %1022 = vmatpush2.msra.mxu0 0.0
    %1023 = vmatprep.subr.mxu0 0.0
    %1024 = vmatpush2.msra.mxu0 0.0
    %1025 = vmatprep.subr.mxu0 0.0
    %1026 = vmatpush2.msra.mxu0 0.0
    %1027 = vmatprep.subr.mxu0 0.0
    %1028 = vmatpush2.msra.mxu0 0.0
    %1029 = vmatprep.subr.mxu0 0.0
    %1030 = vmatpush2.msra.mxu0 0.0
    %1031 = vmatprep.subr.mxu0 0.0
    %1032 = vmatpush2.msra.mxu0 0.0
    %1033 = vmatprep.subr.mxu0 0.0
    %1034 = vmatpush2.msra.mxu0 0.0
    %1035 = vmatprep.subr.mxu0 0.0
    %1036 = vmatpush2.msra.mxu0 0.0
    %1037 = vmatprep.mubr.f32.mxu0 0.0
    %v1038 = vand.u32 %v939, 4294901760
    %v1039 = vsub.f32 %v939, %v1038
    %v1040 = vand.u32 %v1039, 4294901760
    %v1041 = vsub.f32 %v1039, %v1040
    %v1042 = vand.u32 %v1041, 4294901760
    %1043 = vmatmul.mubr.f32.gmra.mxu0 %v1042
    %v1044 = vpop.f32.mrf.mxu0
    %v1045 = vadd.f32 %v956, %v1044
    %v1046 = vpop.f32.mrf.mxu0
    %1047 = vdwg.mxu0
    %1048 = vmatprep.subr.mxu0 0.0
    %v1049 = vand.u32 %v955, 4294901760
    %v1050 = vsub.f32 %v955, %v1049
    %v1051 = vand.u32 %v1050, 4294901760
    %v1052 = vsub.f32 %v1050, %v1051
    %v1053 = vand.u32 %v1052, 4294901760
    %1054 = vmatpush1.msra.mxu0 %v1053
    %1055 = vmatprep.subr.mxu0 0.0
    %v1056 = vand.u32 %v954, 4294901760
    %v1057 = vsub.f32 %v954, %v1056
    %v1058 = vand.u32 %v1057, 4294901760
    %v1059 = vsub.f32 %v1057, %v1058
    %v1060 = vand.u32 %v1059, 4294901760
    %1061 = vmatpush1.msra.mxu0 %v1060
    %1062 = vmatprep.subr.mxu0 0.0
    %v1063 = vand.u32 %v953, 4294901760
    %v1064 = vsub.f32 %v953, %v1063
    %v1065 = vand.u32 %v1064, 4294901760
    %v1066 = vsub.f32 %v1064, %v1065
    %v1067 = vand.u32 %v1066, 4294901760
    %1068 = vmatpush1.msra.mxu0 %v1067
    %1069 = vmatprep.subr.mxu0 0.0
    %v1070 = vand.u32 %v952, 4294901760
    %v1071 = vsub.f32 %v952, %v1070
    %v1072 = vand.u32 %v1071, 4294901760
    %v1073 = vsub.f32 %v1071, %v1072
    %v1074 = vand.u32 %v1073, 4294901760
    %1075 = vmatpush1.msra.mxu0 %v1074
    %1076 = vmatprep.subr.mxu0 0.0
    %v1077 = vand.u32 %v951, 4294901760
    %v1078 = vsub.f32 %v951, %v1077
    %v1079 = vand.u32 %v1078, 4294901760
    %v1080 = vsub.f32 %v1078, %v1079
    %v1081 = vand.u32 %v1080, 4294901760
    %1082 = vmatpush1.msra.mxu0 %v1081
    %1083 = vmatprep.subr.mxu0 0.0
    %v1084 = vand.u32 %v950, 4294901760
    %v1085 = vsub.f32 %v950, %v1084
    %v1086 = vand.u32 %v1085, 4294901760
    %v1087 = vsub.f32 %v1085, %v1086
    %v1088 = vand.u32 %v1087, 4294901760
    %1089 = vmatpush1.msra.mxu0 %v1088
    %1090 = vmatprep.subr.mxu0 0.0
    %v1091 = vand.u32 %v949, 4294901760
    %v1092 = vsub.f32 %v949, %v1091
    %v1093 = vand.u32 %v1092, 4294901760
    %v1094 = vsub.f32 %v1092, %v1093
    %v1095 = vand.u32 %v1094, 4294901760
    %1096 = vmatpush1.msra.mxu0 %v1095
    %1097 = vmatprep.subr.mxu0 0.0
    %v1098 = vand.u32 %v948, 4294901760
    %v1099 = vsub.f32 %v948, %v1098
    %v1100 = vand.u32 %v1099, 4294901760
    %v1101 = vsub.f32 %v1099, %v1100
    %v1102 = vand.u32 %v1101, 4294901760
    %1103 = vmatpush1.msra.mxu0 %v1102
    %1104 = vmatprep.subr.mxu0 0.0
    %v1105 = vand.u32 %v947, 4294901760
    %v1106 = vsub.f32 %v947, %v1105
    %v1107 = vand.u32 %v1106, 4294901760
    %v1108 = vsub.f32 %v1106, %v1107
    %v1109 = vand.u32 %v1108, 4294901760
    %1110 = vmatpush1.msra.mxu0 %v1109
    %1111 = vmatprep.subr.mxu0 0.0
    %v1112 = vand.u32 %v946, 4294901760
    %v1113 = vsub.f32 %v946, %v1112
    %v1114 = vand.u32 %v1113, 4294901760
    %v1115 = vsub.f32 %v1113, %v1114
    %v1116 = vand.u32 %v1115, 4294901760
    %1117 = vmatpush1.msra.mxu0 %v1116
    %1118 = vmatprep.subr.mxu0 0.0
    %v1119 = vand.u32 %v945, 4294901760
    %v1120 = vsub.f32 %v945, %v1119
    %v1121 = vand.u32 %v1120, 4294901760
    %v1122 = vsub.f32 %v1120, %v1121
    %v1123 = vand.u32 %v1122, 4294901760
    %1124 = vmatpush1.msra.mxu0 %v1123
    %1125 = vmatprep.subr.mxu0 0.0
    %v1126 = vand.u32 %v944, 4294901760
    %v1127 = vsub.f32 %v944, %v1126
    %v1128 = vand.u32 %v1127, 4294901760
    %v1129 = vsub.f32 %v1127, %v1128
    %v1130 = vand.u32 %v1129, 4294901760
    %1131 = vmatpush1.msra.mxu0 %v1130
    %1132 = vmatprep.subr.mxu0 0.0
    %v1133 = vand.u32 %v943, 4294901760
    %v1134 = vsub.f32 %v943, %v1133
    %v1135 = vand.u32 %v1134, 4294901760
    %v1136 = vsub.f32 %v1134, %v1135
    %v1137 = vand.u32 %v1136, 4294901760
    %1138 = vmatpush1.msra.mxu0 %v1137
    %1139 = vmatprep.subr.mxu0 0.0
    %v1140 = vand.u32 %v942, 4294901760
    %v1141 = vsub.f32 %v942, %v1140
    %v1142 = vand.u32 %v1141, 4294901760
    %v1143 = vsub.f32 %v1141, %v1142
    %v1144 = vand.u32 %v1143, 4294901760
    %1145 = vmatpush1.msra.mxu0 %v1144
    %1146 = vmatprep.subr.mxu0 0.0
    %v1147 = vand.u32 %v941, 4294901760
    %v1148 = vsub.f32 %v941, %v1147
    %v1149 = vand.u32 %v1148, 4294901760
    %v1150 = vsub.f32 %v1148, %v1149
    %v1151 = vand.u32 %v1150, 4294901760
    %1152 = vmatpush1.msra.mxu0 %v1151
    %1153 = vmatprep.subr.mxu0 0.0
    %v1154 = vand.u32 %v940, 4294901760
    %v1155 = vsub.f32 %v940, %v1154
    %v1156 = vand.u32 %v1155, 4294901760
    %v1157 = vsub.f32 %v1155, %v1156
    %v1158 = vand.u32 %v1157, 4294901760
    %1159 = vmatpush1.msra.mxu0 %v1158
    %1160 = vmatprep.subr.mxu0 0.0
    %1161 = vmatpush2.msra.mxu0 0.0
    %1162 = vmatprep.subr.mxu0 0.0
    %1163 = vmatpush2.msra.mxu0 0.0
    %1164 = vmatprep.subr.mxu0 0.0
    %1165 = vmatpush2.msra.mxu0 0.0
    %1166 = vmatprep.subr.mxu0 0.0
    %1167 = vmatpush2.msra.mxu0 0.0
    %1168 = vmatprep.subr.mxu0 0.0
    %1169 = vmatpush2.msra.mxu0 0.0
    %1170 = vmatprep.subr.mxu0 0.0
    %1171 = vmatpush2.msra.mxu0 0.0
    %1172 = vmatprep.subr.mxu0 0.0
    %1173 = vmatpush2.msra.mxu0 0.0
    %1174 = vmatprep.subr.mxu0 0.0
    %1175 = vmatpush2.msra.mxu0 0.0
    %1176 = vmatprep.subr.mxu0 0.0
    %1177 = vmatpush2.msra.mxu0 0.0
    %1178 = vmatprep.subr.mxu0 0.0
    %1179 = vmatpush2.msra.mxu0 0.0
    %1180 = vmatprep.subr.mxu0 0.0
    %1181 = vmatpush2.msra.mxu0 0.0
    %1182 = vmatprep.subr.mxu0 0.0
    %1183 = vmatpush2.msra.mxu0 0.0
    %1184 = vmatprep.subr.mxu0 0.0
    %1185 = vmatpush2.msra.mxu0 0.0
    %1186 = vmatprep.subr.mxu0 0.0
    %1187 = vmatpush2.msra.mxu0 0.0
    %1188 = vmatprep.subr.mxu0 0.0
    %1189 = vmatpush2.msra.mxu0 0.0
    %1190 = vmatprep.subr.mxu0 0.0
    %1191 = vmatpush2.msra.mxu0 0.0
    %1192 = vmatprep.mubr.f32.mxu0 0.0
    %v1193 = vand.u32 %v939, 4294901760
    %1194 = vmatmul.mubr.f32.gmra.mxu0 %v1193
    %v1195 = vpop.f32.mrf.mxu0
    %v1196 = vadd.f32 %v1045, %v1195
    %v1197 = vpop.f32.mrf.mxu0
    %1198 = vdwg.mxu0
    %1199 = vmatprep.subr.mxu0 0.0
    %v1200 = vand.u32 %v955, 4294901760
    %v1201 = vsub.f32 %v955, %v1200
    %1202 = vmatpush1.msra.mxu0 %v1201
    %1203 = vmatprep.subr.mxu0 0.0
    %v1204 = vand.u32 %v954, 4294901760
    %v1205 = vsub.f32 %v954, %v1204
    %1206 = vmatpush1.msra.mxu0 %v1205
    %1207 = vmatprep.subr.mxu0 0.0
    %v1208 = vand.u32 %v953, 4294901760
    %v1209 = vsub.f32 %v953, %v1208
    %1210 = vmatpush1.msra.mxu0 %v1209
    %1211 = vmatprep.subr.mxu0 0.0
    %v1212 = vand.u32 %v952, 4294901760
    %v1213 = vsub.f32 %v952, %v1212
    %1214 = vmatpush1.msra.mxu0 %v1213
    %1215 = vmatprep.subr.mxu0 0.0
    %v1216 = vand.u32 %v951, 4294901760
    %v1217 = vsub.f32 %v951, %v1216
    %1218 = vmatpush1.msra.mxu0 %v1217
    %1219 = vmatprep.subr.mxu0 0.0
    %v1220 = vand.u32 %v950, 4294901760
    %v1221 = vsub.f32 %v950, %v1220
    %1222 = vmatpush1.msra.mxu0 %v1221
    %1223 = vmatprep.subr.mxu0 0.0
    %v1224 = vand.u32 %v949, 4294901760
    %v1225 = vsub.f32 %v949, %v1224
    %1226 = vmatpush1.msra.mxu0 %v1225
    %1227 = vmatprep.subr.mxu0 0.0
    %v1228 = vand.u32 %v948, 4294901760
    %v1229 = vsub.f32 %v948, %v1228
    %1230 = vmatpush1.msra.mxu0 %v1229
    %1231 = vmatprep.subr.mxu0 0.0
    %v1232 = vand.u32 %v947, 4294901760
    %v1233 = vsub.f32 %v947, %v1232
    %1234 = vmatpush1.msra.mxu0 %v1233
    %1235 = vmatprep.subr.mxu0 0.0
    %v1236 = vand.u32 %v946, 4294901760
    %v1237 = vsub.f32 %v946, %v1236
    %1238 = vmatpush1.msra.mxu0 %v1237
    %1239 = vmatprep.subr.mxu0 0.0
    %v1240 = vand.u32 %v945, 4294901760
    %v1241 = vsub.f32 %v945, %v1240
    %1242 = vmatpush1.msra.mxu0 %v1241
    %1243 = vmatprep.subr.mxu0 0.0
    %v1244 = vand.u32 %v944, 4294901760
    %v1245 = vsub.f32 %v944, %v1244
    %1246 = vmatpush1.msra.mxu0 %v1245
    %1247 = vmatprep.subr.mxu0 0.0
    %v1248 = vand.u32 %v943, 4294901760
    %v1249 = vsub.f32 %v943, %v1248
    %1250 = vmatpush1.msra.mxu0 %v1249
    %1251 = vmatprep.subr.mxu0 0.0
    %v1252 = vand.u32 %v942, 4294901760
    %v1253 = vsub.f32 %v942, %v1252
    %1254 = vmatpush1.msra.mxu0 %v1253
    %1255 = vmatprep.subr.mxu0 0.0
    %v1256 = vand.u32 %v941, 4294901760
    %v1257 = vsub.f32 %v941, %v1256
    %1258 = vmatpush1.msra.mxu0 %v1257
    %1259 = vmatprep.subr.mxu0 0.0
    %v1260 = vand.u32 %v940, 4294901760
    %v1261 = vsub.f32 %v940, %v1260
    %1262 = vmatpush1.msra.mxu0 %v1261
    %1263 = vmatprep.subr.mxu0 0.0
    %1264 = vmatpush2.msra.mxu0 0.0
    %1265 = vmatprep.subr.mxu0 0.0
    %1266 = vmatpush2.msra.mxu0 0.0
    %1267 = vmatprep.subr.mxu0 0.0
    %1268 = vmatpush2.msra.mxu0 0.0
    %1269 = vmatprep.subr.mxu0 0.0
    %1270 = vmatpush2.msra.mxu0 0.0
    %1271 = vmatprep.subr.mxu0 0.0
    %1272 = vmatpush2.msra.mxu0 0.0
    %1273 = vmatprep.subr.mxu0 0.0
    %1274 = vmatpush2.msra.mxu0 0.0
    %1275 = vmatprep.subr.mxu0 0.0
    %1276 = vmatpush2.msra.mxu0 0.0
    %1277 = vmatprep.subr.mxu0 0.0
    %1278 = vmatpush2.msra.mxu0 0.0
    %1279 = vmatprep.subr.mxu0 0.0
    %1280 = vmatpush2.msra.mxu0 0.0
    %1281 = vmatprep.subr.mxu0 0.0
    %1282 = vmatpush2.msra.mxu0 0.0
    %1283 = vmatprep.subr.mxu0 0.0
    %1284 = vmatpush2.msra.mxu0 0.0
    %1285 = vmatprep.subr.mxu0 0.0
    %1286 = vmatpush2.msra.mxu0 0.0
    %1287 = vmatprep.subr.mxu0 0.0
    %1288 = vmatpush2.msra.mxu0 0.0
    %1289 = vmatprep.subr.mxu0 0.0
    %1290 = vmatpush2.msra.mxu0 0.0
    %1291 = vmatprep.subr.mxu0 0.0
    %1292 = vmatpush2.msra.mxu0 0.0
    %1293 = vmatprep.subr.mxu0 0.0
    %1294 = vmatpush2.msra.mxu0 0.0
    %1295 = vmatprep.mubr.f32.mxu0 0.0
    %v1296 = vand.u32 %v939, 4294901760
    %v1297 = vsub.f32 %v939, %v1296
    %1298 = vmatmul.mubr.f32.gmra.mxu0 %v1297
    %v1299 = vpop.f32.mrf.mxu0
    %v1300 = vadd.f32 %v1196, %v1299
    %v1301 = vpop.f32.mrf.mxu0
    %1302 = vdwg.mxu0
    %1303 = vmatprep.subr.mxu0 0.0
    %v1304 = vand.u32 %v955, 4294901760
    %1305 = vmatpush1.msra.mxu0 %v1304
    %1306 = vmatprep.subr.mxu0 0.0
    %v1307 = vand.u32 %v954, 4294901760
    %1308 = vmatpush1.msra.mxu0 %v1307
    %1309 = vmatprep.subr.mxu0 0.0
    %v1310 = vand.u32 %v953, 4294901760
    %1311 = vmatpush1.msra.mxu0 %v1310
    %1312 = vmatprep.subr.mxu0 0.0
    %v1313 = vand.u32 %v952, 4294901760
    %1314 = vmatpush1.msra.mxu0 %v1313
    %1315 = vmatprep.subr.mxu0 0.0
    %v1316 = vand.u32 %v951, 4294901760
    %1317 = vmatpush1.msra.mxu0 %v1316
    %1318 = vmatprep.subr.mxu0 0.0
    %v1319 = vand.u32 %v950, 4294901760
    %1320 = vmatpush1.msra.mxu0 %v1319
    %1321 = vmatprep.subr.mxu0 0.0
    %v1322 = vand.u32 %v949, 4294901760
    %1323 = vmatpush1.msra.mxu0 %v1322
    %1324 = vmatprep.subr.mxu0 0.0
    %v1325 = vand.u32 %v948, 4294901760
    %1326 = vmatpush1.msra.mxu0 %v1325
    %1327 = vmatprep.subr.mxu0 0.0
    %v1328 = vand.u32 %v947, 4294901760
    %1329 = vmatpush1.msra.mxu0 %v1328
    %1330 = vmatprep.subr.mxu0 0.0
    %v1331 = vand.u32 %v946, 4294901760
    %1332 = vmatpush1.msra.mxu0 %v1331
    %1333 = vmatprep.subr.mxu0 0.0
    %v1334 = vand.u32 %v945, 4294901760
    %1335 = vmatpush1.msra.mxu0 %v1334
    %1336 = vmatprep.subr.mxu0 0.0
    %v1337 = vand.u32 %v944, 4294901760
    %1338 = vmatpush1.msra.mxu0 %v1337
    %1339 = vmatprep.subr.mxu0 0.0
    %v1340 = vand.u32 %v943, 4294901760
    %1341 = vmatpush1.msra.mxu0 %v1340
    %1342 = vmatprep.subr.mxu0 0.0
    %v1343 = vand.u32 %v942, 4294901760
    %1344 = vmatpush1.msra.mxu0 %v1343
    %1345 = vmatprep.subr.mxu0 0.0
    %v1346 = vand.u32 %v941, 4294901760
    %1347 = vmatpush1.msra.mxu0 %v1346
    %1348 = vmatprep.subr.mxu0 0.0
    %v1349 = vand.u32 %v940, 4294901760
    %1350 = vmatpush1.msra.mxu0 %v1349
    %1351 = vmatprep.subr.mxu0 0.0
    %1352 = vmatpush2.msra.mxu0 0.0
    %1353 = vmatprep.subr.mxu0 0.0
    %1354 = vmatpush2.msra.mxu0 0.0
    %1355 = vmatprep.subr.mxu0 0.0
    %1356 = vmatpush2.msra.mxu0 0.0
    %1357 = vmatprep.subr.mxu0 0.0
    %1358 = vmatpush2.msra.mxu0 0.0
    %1359 = vmatprep.subr.mxu0 0.0
    %1360 = vmatpush2.msra.mxu0 0.0
    %1361 = vmatprep.subr.mxu0 0.0
    %1362 = vmatpush2.msra.mxu0 0.0
    %1363 = vmatprep.subr.mxu0 0.0
    %1364 = vmatpush2.msra.mxu0 0.0
    %1365 = vmatprep.subr.mxu0 0.0
    %1366 = vmatpush2.msra.mxu0 0.0
    %1367 = vmatprep.subr.mxu0 0.0
    %1368 = vmatpush2.msra.mxu0 0.0
    %1369 = vmatprep.subr.mxu0 0.0
    %1370 = vmatpush2.msra.mxu0 0.0
    %1371 = vmatprep.subr.mxu0 0.0
    %1372 = vmatpush2.msra.mxu0 0.0
    %1373 = vmatprep.subr.mxu0 0.0
    %1374 = vmatpush2.msra.mxu0 0.0
    %1375 = vmatprep.subr.mxu0 0.0
    %1376 = vmatpush2.msra.mxu0 0.0
    %1377 = vmatprep.subr.mxu0 0.0
    %1378 = vmatpush2.msra.mxu0 0.0
    %1379 = vmatprep.subr.mxu0 0.0
    %1380 = vmatpush2.msra.mxu0 0.0
    %1381 = vmatprep.subr.mxu0 0.0
    %1382 = vmatpush2.msra.mxu0 0.0
    %1383 = vmatprep.mubr.f32.mxu0 0.0
    %v1384 = vand.u32 %v939, 4294901760
    %v1385 = vsub.f32 %v939, %v1384
    %v1386 = vand.u32 %v1385, 4294901760
    %1387 = vmatmul.mubr.f32.gmra.mxu0 %v1386
    %v1388 = vpop.f32.mrf.mxu0
    %v1389 = vadd.f32 %v1300, %v1388
    %v1390 = vpop.f32.mrf.mxu0
    %1391 = vdwg.mxu0
    %1392 = vmatprep.subr.mxu0 0.0
    %v1393 = vand.u32 %v955, 4294901760
    %v1394 = vsub.f32 %v955, %v1393
    %v1395 = vand.u32 %v1394, 4294901760
    %1396 = vmatpush1.msra.mxu0 %v1395
    %1397 = vmatprep.subr.mxu0 0.0
    %v1398 = vand.u32 %v954, 4294901760
    %v1399 = vsub.f32 %v954, %v1398
    %v1400 = vand.u32 %v1399, 4294901760
    %1401 = vmatpush1.msra.mxu0 %v1400
    %1402 = vmatprep.subr.mxu0 0.0
    %v1403 = vand.u32 %v953, 4294901760
    %v1404 = vsub.f32 %v953, %v1403
    %v1405 = vand.u32 %v1404, 4294901760
    %1406 = vmatpush1.msra.mxu0 %v1405
    %1407 = vmatprep.subr.mxu0 0.0
    %v1408 = vand.u32 %v952, 4294901760
    %v1409 = vsub.f32 %v952, %v1408
    %v1410 = vand.u32 %v1409, 4294901760
    %1411 = vmatpush1.msra.mxu0 %v1410
    %1412 = vmatprep.subr.mxu0 0.0
    %v1413 = vand.u32 %v951, 4294901760
    %v1414 = vsub.f32 %v951, %v1413
    %v1415 = vand.u32 %v1414, 4294901760
    %1416 = vmatpush1.msra.mxu0 %v1415
    %1417 = vmatprep.subr.mxu0 0.0
    %v1418 = vand.u32 %v950, 4294901760
    %v1419 = vsub.f32 %v950, %v1418
    %v1420 = vand.u32 %v1419, 4294901760
    %1421 = vmatpush1.msra.mxu0 %v1420
    %1422 = vmatprep.subr.mxu0 0.0
    %v1423 = vand.u32 %v949, 4294901760
    %v1424 = vsub.f32 %v949, %v1423
    %v1425 = vand.u32 %v1424, 4294901760
    %1426 = vmatpush1.msra.mxu0 %v1425
    %1427 = vmatprep.subr.mxu0 0.0
    %v1428 = vand.u32 %v948, 4294901760
    %v1429 = vsub.f32 %v948, %v1428
    %v1430 = vand.u32 %v1429, 4294901760
    %1431 = vmatpush1.msra.mxu0 %v1430
    %1432 = vmatprep.subr.mxu0 0.0
    %v1433 = vand.u32 %v947, 4294901760
    %v1434 = vsub.f32 %v947, %v1433
    %v1435 = vand.u32 %v1434, 4294901760
    %1436 = vmatpush1.msra.mxu0 %v1435
    %1437 = vmatprep.subr.mxu0 0.0
    %v1438 = vand.u32 %v946, 4294901760
    %v1439 = vsub.f32 %v946, %v1438
    %v1440 = vand.u32 %v1439, 4294901760
    %1441 = vmatpush1.msra.mxu0 %v1440
    %1442 = vmatprep.subr.mxu0 0.0
    %v1443 = vand.u32 %v945, 4294901760
    %v1444 = vsub.f32 %v945, %v1443
    %v1445 = vand.u32 %v1444, 4294901760
    %1446 = vmatpush1.msra.mxu0 %v1445
    %1447 = vmatprep.subr.mxu0 0.0
    %v1448 = vand.u32 %v944, 4294901760
    %v1449 = vsub.f32 %v944, %v1448
    %v1450 = vand.u32 %v1449, 4294901760
    %1451 = vmatpush1.msra.mxu0 %v1450
    %1452 = vmatprep.subr.mxu0 0.0
    %v1453 = vand.u32 %v943, 4294901760
    %v1454 = vsub.f32 %v943, %v1453
    %v1455 = vand.u32 %v1454, 4294901760
    %1456 = vmatpush1.msra.mxu0 %v1455
    %1457 = vmatprep.subr.mxu0 0.0
    %v1458 = vand.u32 %v942, 4294901760
    %v1459 = vsub.f32 %v942, %v1458
    %v1460 = vand.u32 %v1459, 4294901760
    %1461 = vmatpush1.msra.mxu0 %v1460
    %1462 = vmatprep.subr.mxu0 0.0
    %v1463 = vand.u32 %v941, 4294901760
    %v1464 = vsub.f32 %v941, %v1463
    %v1465 = vand.u32 %v1464, 4294901760
    %1466 = vmatpush1.msra.mxu0 %v1465
    %1467 = vmatprep.subr.mxu0 0.0
    %v1468 = vand.u32 %v940, 4294901760
    %v1469 = vsub.f32 %v940, %v1468
    %v1470 = vand.u32 %v1469, 4294901760
    %1471 = vmatpush1.msra.mxu0 %v1470
    %1472 = vmatprep.subr.mxu0 0.0
    %1473 = vmatpush2.msra.mxu0 0.0
    %1474 = vmatprep.subr.mxu0 0.0
    %1475 = vmatpush2.msra.mxu0 0.0
    %1476 = vmatprep.subr.mxu0 0.0
    %1477 = vmatpush2.msra.mxu0 0.0
    %1478 = vmatprep.subr.mxu0 0.0
    %1479 = vmatpush2.msra.mxu0 0.0
    %1480 = vmatprep.subr.mxu0 0.0
    %1481 = vmatpush2.msra.mxu0 0.0
    %1482 = vmatprep.subr.mxu0 0.0
    %1483 = vmatpush2.msra.mxu0 0.0
    %1484 = vmatprep.subr.mxu0 0.0
    %1485 = vmatpush2.msra.mxu0 0.0
    %1486 = vmatprep.subr.mxu0 0.0
    %1487 = vmatpush2.msra.mxu0 0.0
    %1488 = vmatprep.subr.mxu0 0.0
    %1489 = vmatpush2.msra.mxu0 0.0
    %1490 = vmatprep.subr.mxu0 0.0
    %1491 = vmatpush2.msra.mxu0 0.0
    %1492 = vmatprep.subr.mxu0 0.0
    %1493 = vmatpush2.msra.mxu0 0.0
    %1494 = vmatprep.subr.mxu0 0.0
    %1495 = vmatpush2.msra.mxu0 0.0
    %1496 = vmatprep.subr.mxu0 0.0
    %1497 = vmatpush2.msra.mxu0 0.0
    %1498 = vmatprep.subr.mxu0 0.0
    %1499 = vmatpush2.msra.mxu0 0.0
    %1500 = vmatprep.subr.mxu0 0.0
    %1501 = vmatpush2.msra.mxu0 0.0
    %1502 = vmatprep.subr.mxu0 0.0
    %1503 = vmatpush2.msra.mxu0 0.0
    %1504 = vmatprep.mubr.f32.mxu0 0.0
    %v1505 = vand.u32 %v939, 4294901760
    %1506 = vmatmul.mubr.f32.gmra.mxu0 %v1505
    %v1507 = vpop.f32.mrf.mxu0
    %v1508 = vadd.f32 %v1389, %v1507
    %v1509 = vpop.f32.mrf.mxu0
    %1510 = vdwg.mxu0
    %1511 = vmatprep.subr.mxu0 0.0
    %v1512 = vand.u32 %v955, 4294901760
    %1513 = vmatpush1.msra.mxu0 %v1512
    %1514 = vmatprep.subr.mxu0 0.0
    %v1515 = vand.u32 %v954, 4294901760
    %1516 = vmatpush1.msra.mxu0 %v1515
    %1517 = vmatprep.subr.mxu0 0.0
    %v1518 = vand.u32 %v953, 4294901760
    %1519 = vmatpush1.msra.mxu0 %v1518
    %1520 = vmatprep.subr.mxu0 0.0
    %v1521 = vand.u32 %v952, 4294901760
    %1522 = vmatpush1.msra.mxu0 %v1521
    %1523 = vmatprep.subr.mxu0 0.0
    %v1524 = vand.u32 %v951, 4294901760
    %1525 = vmatpush1.msra.mxu0 %v1524
    %1526 = vmatprep.subr.mxu0 0.0
    %v1527 = vand.u32 %v950, 4294901760
    %1528 = vmatpush1.msra.mxu0 %v1527
    %1529 = vmatprep.subr.mxu0 0.0
    %v1530 = vand.u32 %v949, 4294901760
    %1531 = vmatpush1.msra.mxu0 %v1530
    %1532 = vmatprep.subr.mxu0 0.0
    %v1533 = vand.u32 %v948, 4294901760
    %1534 = vmatpush1.msra.mxu0 %v1533
    %1535 = vmatprep.subr.mxu0 0.0
    %v1536 = vand.u32 %v947, 4294901760
    %1537 = vmatpush1.msra.mxu0 %v1536
    %1538 = vmatprep.subr.mxu0 0.0
    %v1539 = vand.u32 %v946, 4294901760
    %1540 = vmatpush1.msra.mxu0 %v1539
    %1541 = vmatprep.subr.mxu0 0.0
    %v1542 = vand.u32 %v945, 4294901760
    %1543 = vmatpush1.msra.mxu0 %v1542
    %1544 = vmatprep.subr.mxu0 0.0
    %v1545 = vand.u32 %v944, 4294901760
    %1546 = vmatpush1.msra.mxu0 %v1545
    %1547 = vmatprep.subr.mxu0 0.0
    %v1548 = vand.u32 %v943, 4294901760
    %1549 = vmatpush1.msra.mxu0 %v1548
    %1550 = vmatprep.subr.mxu0 0.0
    %v1551 = vand.u32 %v942, 4294901760
    %1552 = vmatpush1.msra.mxu0 %v1551
    %1553 = vmatprep.subr.mxu0 0.0
    %v1554 = vand.u32 %v941, 4294901760
    %1555 = vmatpush1.msra.mxu0 %v1554
    %1556 = vmatprep.subr.mxu0 0.0
    %v1557 = vand.u32 %v940, 4294901760
    %1558 = vmatpush1.msra.mxu0 %v1557
    %1559 = vmatprep.subr.mxu0 0.0
    %1560 = vmatpush2.msra.mxu0 0.0
    %1561 = vmatprep.subr.mxu0 0.0
    %1562 = vmatpush2.msra.mxu0 0.0
    %1563 = vmatprep.subr.mxu0 0.0
    %1564 = vmatpush2.msra.mxu0 0.0
    %1565 = vmatprep.subr.mxu0 0.0
    %1566 = vmatpush2.msra.mxu0 0.0
    %1567 = vmatprep.subr.mxu0 0.0
    %1568 = vmatpush2.msra.mxu0 0.0
    %1569 = vmatprep.subr.mxu0 0.0
    %1570 = vmatpush2.msra.mxu0 0.0
    %1571 = vmatprep.subr.mxu0 0.0
    %1572 = vmatpush2.msra.mxu0 0.0
    %1573 = vmatprep.subr.mxu0 0.0
    %1574 = vmatpush2.msra.mxu0 0.0
    %1575 = vmatprep.subr.mxu0 0.0
    %1576 = vmatpush2.msra.mxu0 0.0
    %1577 = vmatprep.subr.mxu0 0.0
    %1578 = vmatpush2.msra.mxu0 0.0
    %1579 = vmatprep.subr.mxu0 0.0
    %1580 = vmatpush2.msra.mxu0 0.0
    %1581 = vmatprep.subr.mxu0 0.0
    %1582 = vmatpush2.msra.mxu0 0.0
    %1583 = vmatprep.subr.mxu0 0.0
    %1584 = vmatpush2.msra.mxu0 0.0
    %1585 = vmatprep.subr.mxu0 0.0
    %1586 = vmatpush2.msra.mxu0 0.0
    %1587 = vmatprep.subr.mxu0 0.0
    %1588 = vmatpush2.msra.mxu0 0.0
    %1589 = vmatprep.subr.mxu0 0.0
    %1590 = vmatpush2.msra.mxu0 0.0
    %1591 = vmatprep.mubr.f32.mxu0 0.0
    %v1592 = vand.u32 %v939, 4294901760
    %1593 = vmatmul.mubr.f32.gmra.mxu0 %v1592
    %v1594 = vpop.f32.mrf.mxu0
    %v1595 = vadd.f32 %v1508, %v1594
    %v1596 = vpop.f32.mrf.mxu0
    %1597 = vdwg.mxu0
    %v1598 = vmax.f32 %v1595, 0.0
    %v1599 = vld [vmem:[#allocation2 + $0xa0] sm:$0xff]
    %v1600 = vld [vmem:[#allocation2 + $0xa8] sm:$0xff]
    %v1601 = vld [vmem:[#allocation2 + $0xb0] sm:$0xff]
    %v1602 = vld [vmem:[#allocation2 + $0xb8] sm:$0xff]
    %v1603 = vld [vmem:[#allocation2 + $0xc0] sm:$0xff]
    %v1604 = vld [vmem:[#allocation2 + $0xc8] sm:$0xff]
    %v1605 = vld [vmem:[#allocation2 + $0xd0] sm:$0xff]
    %v1606 = vld [vmem:[#allocation2 + $0xd8] sm:$0xff]
    %v1607 = vld [vmem:[#allocation2 + $0xe0] sm:$0xff]
    %v1608 = vld [vmem:[#allocation2 + $0xe8] sm:$0xff]
    %v1609 = vld [vmem:[#allocation2 + $0xf0] sm:$0xff]
    %v1610 = vld [vmem:[#allocation2 + $0xf8] sm:$0xff]
    %v1611 = vld [vmem:[#allocation2 + $0x100] sm:$0xff]
    %v1612 = vld [vmem:[#allocation2 + $0x108] sm:$0xff]
    %v1613 = vld [vmem:[#allocation2 + $0x110] sm:$0xff]
    %v1614 = vld [vmem:[#allocation2 + $0x118] sm:$0xff]
    %v1615 = vld [vmem:[#allocation2 + $0x120] sm:$0xff]
    %1616 = vmatprep.subr.mxu0 0.0
    %v1617 = vand.u32 %v1614, 4294901760
    %1618 = vmatpush1.msra.mxu0 %v1617
    %1619 = vmatprep.subr.mxu0 0.0
    %v1620 = vand.u32 %v1613, 4294901760
    %1621 = vmatpush1.msra.mxu0 %v1620
    %1622 = vmatprep.subr.mxu0 0.0
    %v1623 = vand.u32 %v1612, 4294901760
    %1624 = vmatpush1.msra.mxu0 %v1623
    %1625 = vmatprep.subr.mxu0 0.0
    %v1626 = vand.u32 %v1611, 4294901760
    %1627 = vmatpush1.msra.mxu0 %v1626
    %1628 = vmatprep.subr.mxu0 0.0
    %v1629 = vand.u32 %v1610, 4294901760
    %1630 = vmatpush1.msra.mxu0 %v1629
    %1631 = vmatprep.subr.mxu0 0.0
    %v1632 = vand.u32 %v1609, 4294901760
    %1633 = vmatpush1.msra.mxu0 %v1632
    %1634 = vmatprep.subr.mxu0 0.0
    %v1635 = vand.u32 %v1608, 4294901760
    %1636 = vmatpush1.msra.mxu0 %v1635
    %1637 = vmatprep.subr.mxu0 0.0
    %v1638 = vand.u32 %v1607, 4294901760
    %1639 = vmatpush1.msra.mxu0 %v1638
    %1640 = vmatprep.subr.mxu0 0.0
    %v1641 = vand.u32 %v1606, 4294901760
    %1642 = vmatpush1.msra.mxu0 %v1641
    %1643 = vmatprep.subr.mxu0 0.0
    %v1644 = vand.u32 %v1605, 4294901760
    %1645 = vmatpush1.msra.mxu0 %v1644
    %1646 = vmatprep.subr.mxu0 0.0
    %v1647 = vand.u32 %v1604, 4294901760
    %1648 = vmatpush1.msra.mxu0 %v1647
    %1649 = vmatprep.subr.mxu0 0.0
    %v1650 = vand.u32 %v1603, 4294901760
    %1651 = vmatpush1.msra.mxu0 %v1650
    %1652 = vmatprep.subr.mxu0 0.0
    %v1653 = vand.u32 %v1602, 4294901760
    %1654 = vmatpush1.msra.mxu0 %v1653
    %1655 = vmatprep.subr.mxu0 0.0
    %v1656 = vand.u32 %v1601, 4294901760
    %1657 = vmatpush1.msra.mxu0 %v1656
    %1658 = vmatprep.subr.mxu0 0.0
    %v1659 = vand.u32 %v1600, 4294901760
    %1660 = vmatpush1.msra.mxu0 %v1659
    %1661 = vmatprep.subr.mxu0 0.0
    %v1662 = vand.u32 %v1599, 4294901760
    %1663 = vmatpush1.msra.mxu0 %v1662
    %1664 = vmatprep.subr.mxu0 0.0
    %1665 = vmatpush2.msra.mxu0 0.0
    %1666 = vmatprep.subr.mxu0 0.0
    %1667 = vmatpush2.msra.mxu0 0.0
    %1668 = vmatprep.subr.mxu0 0.0
    %1669 = vmatpush2.msra.mxu0 0.0
    %1670 = vmatprep.subr.mxu0 0.0
    %1671 = vmatpush2.msra.mxu0 0.0
    %1672 = vmatprep.subr.mxu0 0.0
    %1673 = vmatpush2.msra.mxu0 0.0
    %1674 = vmatprep.subr.mxu0 0.0
    %1675 = vmatpush2.msra.mxu0 0.0
    %1676 = vmatprep.subr.mxu0 0.0
    %1677 = vmatpush2.msra.mxu0 0.0
    %1678 = vmatprep.subr.mxu0 0.0
    %1679 = vmatpush2.msra.mxu0 0.0
    %1680 = vmatprep.subr.mxu0 0.0
    %1681 = vmatpush2.msra.mxu0 0.0
    %1682 = vmatprep.subr.mxu0 0.0
    %1683 = vmatpush2.msra.mxu0 0.0
    %1684 = vmatprep.subr.mxu0 0.0
    %1685 = vmatpush2.msra.mxu0 0.0
    %1686 = vmatprep.subr.mxu0 0.0
    %1687 = vmatpush2.msra.mxu0 0.0
    %1688 = vmatprep.subr.mxu0 0.0
    %1689 = vmatpush2.msra.mxu0 0.0
    %1690 = vmatprep.subr.mxu0 0.0
    %1691 = vmatpush2.msra.mxu0 0.0
    %1692 = vmatprep.subr.mxu0 0.0
    %1693 = vmatpush2.msra.mxu0 0.0
    %1694 = vmatprep.subr.mxu0 0.0
    %1695 = vmatpush2.msra.mxu0 0.0
    %1696 = vmatprep.mubr.f32.mxu0 0.0
    %v1697 = vand.u32 %v1598, 4294901760
    %v1698 = vsub.f32 %v1598, %v1697
    %v1699 = vand.u32 %v1698, 4294901760
    %v1700 = vsub.f32 %v1698, %v1699
    %v1701 = vand.u32 %v1700, 4294901760
    %1702 = vmatmul.mubr.f32.gmra.mxu0 %v1701
    %v1703 = vpop.f32.mrf.mxu0
    %v1704 = vadd.f32 %v1615, %v1703
    %v1705 = vpop.f32.mrf.mxu0
    %1706 = vdwg.mxu0
    %1707 = vmatprep.subr.mxu0 0.0
    %v1708 = vand.u32 %v1614, 4294901760
    %v1709 = vsub.f32 %v1614, %v1708
    %v1710 = vand.u32 %v1709, 4294901760
    %v1711 = vsub.f32 %v1709, %v1710
    %v1712 = vand.u32 %v1711, 4294901760
    %1713 = vmatpush1.msra.mxu0 %v1712
    %1714 = vmatprep.subr.mxu0 0.0
    %v1715 = vand.u32 %v1613, 4294901760
    %v1716 = vsub.f32 %v1613, %v1715
    %v1717 = vand.u32 %v1716, 4294901760
    %v1718 = vsub.f32 %v1716, %v1717
    %v1719 = vand.u32 %v1718, 4294901760
    %1720 = vmatpush1.msra.mxu0 %v1719
    %1721 = vmatprep.subr.mxu0 0.0
    %v1722 = vand.u32 %v1612, 4294901760
    %v1723 = vsub.f32 %v1612, %v1722
    %v1724 = vand.u32 %v1723, 4294901760
    %v1725 = vsub.f32 %v1723, %v1724
    %v1726 = vand.u32 %v1725, 4294901760
    %1727 = vmatpush1.msra.mxu0 %v1726
    %1728 = vmatprep.subr.mxu0 0.0
    %v1729 = vand.u32 %v1611, 4294901760
    %v1730 = vsub.f32 %v1611, %v1729
    %v1731 = vand.u32 %v1730, 4294901760
    %v1732 = vsub.f32 %v1730, %v1731
    %v1733 = vand.u32 %v1732, 4294901760
    %1734 = vmatpush1.msra.mxu0 %v1733
    %1735 = vmatprep.subr.mxu0 0.0
    %v1736 = vand.u32 %v1610, 4294901760
    %v1737 = vsub.f32 %v1610, %v1736
    %v1738 = vand.u32 %v1737, 4294901760
    %v1739 = vsub.f32 %v1737, %v1738
    %v1740 = vand.u32 %v1739, 4294901760
    %1741 = vmatpush1.msra.mxu0 %v1740
    %1742 = vmatprep.subr.mxu0 0.0
    %v1743 = vand.u32 %v1609, 4294901760
    %v1744 = vsub.f32 %v1609, %v1743
    %v1745 = vand.u32 %v1744, 4294901760
    %v1746 = vsub.f32 %v1744, %v1745
    %v1747 = vand.u32 %v1746, 4294901760
    %1748 = vmatpush1.msra.mxu0 %v1747
    %1749 = vmatprep.subr.mxu0 0.0
    %v1750 = vand.u32 %v1608, 4294901760
    %v1751 = vsub.f32 %v1608, %v1750
    %v1752 = vand.u32 %v1751, 4294901760
    %v1753 = vsub.f32 %v1751, %v1752
    %v1754 = vand.u32 %v1753, 4294901760
    %1755 = vmatpush1.msra.mxu0 %v1754
    %1756 = vmatprep.subr.mxu0 0.0
    %v1757 = vand.u32 %v1607, 4294901760
    %v1758 = vsub.f32 %v1607, %v1757
    %v1759 = vand.u32 %v1758, 4294901760
    %v1760 = vsub.f32 %v1758, %v1759
    %v1761 = vand.u32 %v1760, 4294901760
    %1762 = vmatpush1.msra.mxu0 %v1761
    %1763 = vmatprep.subr.mxu0 0.0
    %v1764 = vand.u32 %v1606, 4294901760
    %v1765 = vsub.f32 %v1606, %v1764
    %v1766 = vand.u32 %v1765, 4294901760
    %v1767 = vsub.f32 %v1765, %v1766
    %v1768 = vand.u32 %v1767, 4294901760
    %1769 = vmatpush1.msra.mxu0 %v1768
    %1770 = vmatprep.subr.mxu0 0.0
    %v1771 = vand.u32 %v1605, 4294901760
    %v1772 = vsub.f32 %v1605, %v1771
    %v1773 = vand.u32 %v1772, 4294901760
    %v1774 = vsub.f32 %v1772, %v1773
    %v1775 = vand.u32 %v1774, 4294901760
    %1776 = vmatpush1.msra.mxu0 %v1775
    %1777 = vmatprep.subr.mxu0 0.0
    %v1778 = vand.u32 %v1604, 4294901760
    %v1779 = vsub.f32 %v1604, %v1778
    %v1780 = vand.u32 %v1779, 4294901760
    %v1781 = vsub.f32 %v1779, %v1780
    %v1782 = vand.u32 %v1781, 4294901760
    %1783 = vmatpush1.msra.mxu0 %v1782
    %1784 = vmatprep.subr.mxu0 0.0
    %v1785 = vand.u32 %v1603, 4294901760
    %v1786 = vsub.f32 %v1603, %v1785
    %v1787 = vand.u32 %v1786, 4294901760
    %v1788 = vsub.f32 %v1786, %v1787
    %v1789 = vand.u32 %v1788, 4294901760
    %1790 = vmatpush1.msra.mxu0 %v1789
    %1791 = vmatprep.subr.mxu0 0.0
    %v1792 = vand.u32 %v1602, 4294901760
    %v1793 = vsub.f32 %v1602, %v1792
    %v1794 = vand.u32 %v1793, 4294901760
    %v1795 = vsub.f32 %v1793, %v1794
    %v1796 = vand.u32 %v1795, 4294901760
    %1797 = vmatpush1.msra.mxu0 %v1796
    %1798 = vmatprep.subr.mxu0 0.0
    %v1799 = vand.u32 %v1601, 4294901760
    %v1800 = vsub.f32 %v1601, %v1799
    %v1801 = vand.u32 %v1800, 4294901760
    %v1802 = vsub.f32 %v1800, %v1801
    %v1803 = vand.u32 %v1802, 4294901760
    %1804 = vmatpush1.msra.mxu0 %v1803
    %1805 = vmatprep.subr.mxu0 0.0
    %v1806 = vand.u32 %v1600, 4294901760
    %v1807 = vsub.f32 %v1600, %v1806
    %v1808 = vand.u32 %v1807, 4294901760
    %v1809 = vsub.f32 %v1807, %v1808
    %v1810 = vand.u32 %v1809, 4294901760
    %1811 = vmatpush1.msra.mxu0 %v1810
    %1812 = vmatprep.subr.mxu0 0.0
    %v1813 = vand.u32 %v1599, 4294901760
    %v1814 = vsub.f32 %v1599, %v1813
    %v1815 = vand.u32 %v1814, 4294901760
    %v1816 = vsub.f32 %v1814, %v1815
    %v1817 = vand.u32 %v1816, 4294901760
    %1818 = vmatpush1.msra.mxu0 %v1817
    %1819 = vmatprep.subr.mxu0 0.0
    %1820 = vmatpush2.msra.mxu0 0.0
    %1821 = vmatprep.subr.mxu0 0.0
    %1822 = vmatpush2.msra.mxu0 0.0
    %1823 = vmatprep.subr.mxu0 0.0
    %1824 = vmatpush2.msra.mxu0 0.0
    %1825 = vmatprep.subr.mxu0 0.0
    %1826 = vmatpush2.msra.mxu0 0.0
    %1827 = vmatprep.subr.mxu0 0.0
    %1828 = vmatpush2.msra.mxu0 0.0
    %1829 = vmatprep.subr.mxu0 0.0
    %1830 = vmatpush2.msra.mxu0 0.0
    %1831 = vmatprep.subr.mxu0 0.0
    %1832 = vmatpush2.msra.mxu0 0.0
    %1833 = vmatprep.subr.mxu0 0.0
    %1834 = vmatpush2.msra.mxu0 0.0
    %1835 = vmatprep.subr.mxu0 0.0
    %1836 = vmatpush2.msra.mxu0 0.0
    %1837 = vmatprep.subr.mxu0 0.0
    %1838 = vmatpush2.msra.mxu0 0.0
    %1839 = vmatprep.subr.mxu0 0.0
    %1840 = vmatpush2.msra.mxu0 0.0
    %1841 = vmatprep.subr.mxu0 0.0
    %1842 = vmatpush2.msra.mxu0 0.0
    %1843 = vmatprep.subr.mxu0 0.0
    %1844 = vmatpush2.msra.mxu0 0.0
    %1845 = vmatprep.subr.mxu0 0.0
    %1846 = vmatpush2.msra.mxu0 0.0
    %1847 = vmatprep.subr.mxu0 0.0
    %1848 = vmatpush2.msra.mxu0 0.0
    %1849 = vmatprep.subr.mxu0 0.0
    %1850 = vmatpush2.msra.mxu0 0.0
    %1851 = vmatprep.mubr.f32.mxu0 0.0
    %v1852 = vand.u32 %v1598, 4294901760
    %1853 = vmatmul.mubr.f32.gmra.mxu0 %v1852
    %v1854 = vpop.f32.mrf.mxu0
    %v1855 = vadd.f32 %v1704, %v1854
    %v1856 = vpop.f32.mrf.mxu0
    %1857 = vdwg.mxu0
    %1858 = vmatprep.subr.mxu0 0.0
    %v1859 = vand.u32 %v1614, 4294901760
    %v1860 = vsub.f32 %v1614, %v1859
    %1861 = vmatpush1.msra.mxu0 %v1860
    %1862 = vmatprep.subr.mxu0 0.0
    %v1863 = vand.u32 %v1613, 4294901760
    %v1864 = vsub.f32 %v1613, %v1863
    %1865 = vmatpush1.msra.mxu0 %v1864
    %1866 = vmatprep.subr.mxu0 0.0
    %v1867 = vand.u32 %v1612, 4294901760
    %v1868 = vsub.f32 %v1612, %v1867
    %1869 = vmatpush1.msra.mxu0 %v1868
    %1870 = vmatprep.subr.mxu0 0.0
    %v1871 = vand.u32 %v1611, 4294901760
    %v1872 = vsub.f32 %v1611, %v1871
    %1873 = vmatpush1.msra.mxu0 %v1872
    %1874 = vmatprep.subr.mxu0 0.0
    %v1875 = vand.u32 %v1610, 4294901760
    %v1876 = vsub.f32 %v1610, %v1875
    %1877 = vmatpush1.msra.mxu0 %v1876
    %1878 = vmatprep.subr.mxu0 0.0
    %v1879 = vand.u32 %v1609, 4294901760
    %v1880 = vsub.f32 %v1609, %v1879
    %1881 = vmatpush1.msra.mxu0 %v1880
    %1882 = vmatprep.subr.mxu0 0.0
    %v1883 = vand.u32 %v1608, 4294901760
    %v1884 = vsub.f32 %v1608, %v1883
    %1885 = vmatpush1.msra.mxu0 %v1884
    %1886 = vmatprep.subr.mxu0 0.0
    %v1887 = vand.u32 %v1607, 4294901760
    %v1888 = vsub.f32 %v1607, %v1887
    %1889 = vmatpush1.msra.mxu0 %v1888
    %1890 = vmatprep.subr.mxu0 0.0
    %v1891 = vand.u32 %v1606, 4294901760
    %v1892 = vsub.f32 %v1606, %v1891
    %1893 = vmatpush1.msra.mxu0 %v1892
    %1894 = vmatprep.subr.mxu0 0.0
    %v1895 = vand.u32 %v1605, 4294901760
    %v1896 = vsub.f32 %v1605, %v1895
    %1897 = vmatpush1.msra.mxu0 %v1896
    %1898 = vmatprep.subr.mxu0 0.0
    %v1899 = vand.u32 %v1604, 4294901760
    %v1900 = vsub.f32 %v1604, %v1899
    %1901 = vmatpush1.msra.mxu0 %v1900
    %1902 = vmatprep.subr.mxu0 0.0
    %v1903 = vand.u32 %v1603, 4294901760
    %v1904 = vsub.f32 %v1603, %v1903
    %1905 = vmatpush1.msra.mxu0 %v1904
    %1906 = vmatprep.subr.mxu0 0.0
    %v1907 = vand.u32 %v1602, 4294901760
    %v1908 = vsub.f32 %v1602, %v1907
    %1909 = vmatpush1.msra.mxu0 %v1908
    %1910 = vmatprep.subr.mxu0 0.0
    %v1911 = vand.u32 %v1601, 4294901760
    %v1912 = vsub.f32 %v1601, %v1911
    %1913 = vmatpush1.msra.mxu0 %v1912
    %1914 = vmatprep.subr.mxu0 0.0
    %v1915 = vand.u32 %v1600, 4294901760
    %v1916 = vsub.f32 %v1600, %v1915
    %1917 = vmatpush1.msra.mxu0 %v1916
    %1918 = vmatprep.subr.mxu0 0.0
    %v1919 = vand.u32 %v1599, 4294901760
    %v1920 = vsub.f32 %v1599, %v1919
    %1921 = vmatpush1.msra.mxu0 %v1920
    %1922 = vmatprep.subr.mxu0 0.0
    %1923 = vmatpush2.msra.mxu0 0.0
    %1924 = vmatprep.subr.mxu0 0.0
    %1925 = vmatpush2.msra.mxu0 0.0
    %1926 = vmatprep.subr.mxu0 0.0
    %1927 = vmatpush2.msra.mxu0 0.0
    %1928 = vmatprep.subr.mxu0 0.0
    %1929 = vmatpush2.msra.mxu0 0.0
    %1930 = vmatprep.subr.mxu0 0.0
    %1931 = vmatpush2.msra.mxu0 0.0
    %1932 = vmatprep.subr.mxu0 0.0
    %1933 = vmatpush2.msra.mxu0 0.0
    %1934 = vmatprep.subr.mxu0 0.0
    %1935 = vmatpush2.msra.mxu0 0.0
    %1936 = vmatprep.subr.mxu0 0.0
    %1937 = vmatpush2.msra.mxu0 0.0
    %1938 = vmatprep.subr.mxu0 0.0
    %1939 = vmatpush2.msra.mxu0 0.0
    %1940 = vmatprep.subr.mxu0 0.0
    %1941 = vmatpush2.msra.mxu0 0.0
    %1942 = vmatprep.subr.mxu0 0.0
    %1943 = vmatpush2.msra.mxu0 0.0
    %1944 = vmatprep.subr.mxu0 0.0
    %1945 = vmatpush2.msra.mxu0 0.0
    %1946 = vmatprep.subr.mxu0 0.0
    %1947 = vmatpush2.msra.mxu0 0.0
    %1948 = vmatprep.subr.mxu0 0.0
    %1949 = vmatpush2.msra.mxu0 0.0
    %1950 = vmatprep.subr.mxu0 0.0
    %1951 = vmatpush2.msra.mxu0 0.0
    %1952 = vmatprep.subr.mxu0 0.0
    %1953 = vmatpush2.msra.mxu0 0.0
    %1954 = vmatprep.mubr.f32.mxu0 0.0
    %v1955 = vand.u32 %v1598, 4294901760
    %v1956 = vsub.f32 %v1598, %v1955
    %1957 = vmatmul.mubr.f32.gmra.mxu0 %v1956
    %v1958 = vpop.f32.mrf.mxu0
    %v1959 = vadd.f32 %v1855, %v1958
    %v1960 = vpop.f32.mrf.mxu0
    %1961 = vdwg.mxu0
    %1962 = vmatprep.subr.mxu0 0.0
    %v1963 = vand.u32 %v1614, 4294901760
    %1964 = vmatpush1.msra.mxu0 %v1963
    %1965 = vmatprep.subr.mxu0 0.0
    %v1966 = vand.u32 %v1613, 4294901760
    %1967 = vmatpush1.msra.mxu0 %v1966
    %1968 = vmatprep.subr.mxu0 0.0
    %v1969 = vand.u32 %v1612, 4294901760
    %1970 = vmatpush1.msra.mxu0 %v1969
    %1971 = vmatprep.subr.mxu0 0.0
    %v1972 = vand.u32 %v1611, 4294901760
    %1973 = vmatpush1.msra.mxu0 %v1972
    %1974 = vmatprep.subr.mxu0 0.0
    %v1975 = vand.u32 %v1610, 4294901760
    %1976 = vmatpush1.msra.mxu0 %v1975
    %1977 = vmatprep.subr.mxu0 0.0
    %v1978 = vand.u32 %v1609, 4294901760
    %1979 = vmatpush1.msra.mxu0 %v1978
    %1980 = vmatprep.subr.mxu0 0.0
    %v1981 = vand.u32 %v1608, 4294901760
    %1982 = vmatpush1.msra.mxu0 %v1981
    %1983 = vmatprep.subr.mxu0 0.0
    %v1984 = vand.u32 %v1607, 4294901760
    %1985 = vmatpush1.msra.mxu0 %v1984
    %1986 = vmatprep.subr.mxu0 0.0
    %v1987 = vand.u32 %v1606, 4294901760
    %1988 = vmatpush1.msra.mxu0 %v1987
    %1989 = vmatprep.subr.mxu0 0.0
    %v1990 = vand.u32 %v1605, 4294901760
    %1991 = vmatpush1.msra.mxu0 %v1990
    %1992 = vmatprep.subr.mxu0 0.0
    %v1993 = vand.u32 %v1604, 4294901760
    %1994 = vmatpush1.msra.mxu0 %v1993
    %1995 = vmatprep.subr.mxu0 0.0
    %v1996 = vand.u32 %v1603, 4294901760
    %1997 = vmatpush1.msra.mxu0 %v1996
    %1998 = vmatprep.subr.mxu0 0.0
    %v1999 = vand.u32 %v1602, 4294901760
    %2000 = vmatpush1.msra.mxu0 %v1999
    %2001 = vmatprep.subr.mxu0 0.0
    %v2002 = vand.u32 %v1601, 4294901760
    %2003 = vmatpush1.msra.mxu0 %v2002
    %2004 = vmatprep.subr.mxu0 0.0
    %v2005 = vand.u32 %v1600, 4294901760
    %2006 = vmatpush1.msra.mxu0 %v2005
    %2007 = vmatprep.subr.mxu0 0.0
    %v2008 = vand.u32 %v1599, 4294901760
    %2009 = vmatpush1.msra.mxu0 %v2008
    %2010 = vmatprep.subr.mxu0 0.0
    %2011 = vmatpush2.msra.mxu0 0.0
    %2012 = vmatprep.subr.mxu0 0.0
    %2013 = vmatpush2.msra.mxu0 0.0
    %2014 = vmatprep.subr.mxu0 0.0
    %2015 = vmatpush2.msra.mxu0 0.0
    %2016 = vmatprep.subr.mxu0 0.0
    %2017 = vmatpush2.msra.mxu0 0.0
    %2018 = vmatprep.subr.mxu0 0.0
    %2019 = vmatpush2.msra.mxu0 0.0
    %2020 = vmatprep.subr.mxu0 0.0
    %2021 = vmatpush2.msra.mxu0 0.0
    %2022 = vmatprep.subr.mxu0 0.0
    %2023 = vmatpush2.msra.mxu0 0.0
    %2024 = vmatprep.subr.mxu0 0.0
    %2025 = vmatpush2.msra.mxu0 0.0
    %2026 = vmatprep.subr.mxu0 0.0
    %2027 = vmatpush2.msra.mxu0 0.0
    %2028 = vmatprep.subr.mxu0 0.0
    %2029 = vmatpush2.msra.mxu0 0.0
    %2030 = vmatprep.subr.mxu0 0.0
    %2031 = vmatpush2.msra.mxu0 0.0
    %2032 = vmatprep.subr.mxu0 0.0
    %2033 = vmatpush2.msra.mxu0 0.0
    %2034 = vmatprep.subr.mxu0 0.0
    %2035 = vmatpush2.msra.mxu0 0.0
    %2036 = vmatprep.subr.mxu0 0.0
    %2037 = vmatpush2.msra.mxu0 0.0
    %2038 = vmatprep.subr.mxu0 0.0
    %2039 = vmatpush2.msra.mxu0 0.0
    %2040 = vmatprep.subr.mxu0 0.0
    %2041 = vmatpush2.msra.mxu0 0.0
    %2042 = vmatprep.mubr.f32.mxu0 0.0
    %v2043 = vand.u32 %v1598, 4294901760
    %v2044 = vsub.f32 %v1598, %v2043
    %v2045 = vand.u32 %v2044, 4294901760
    %2046 = vmatmul.mubr.f32.gmra.mxu0 %v2045
    %v2047 = vpop.f32.mrf.mxu0
    %v2048 = vadd.f32 %v1959, %v2047
    %v2049 = vpop.f32.mrf.mxu0
    %2050 = vdwg.mxu0
    %2051 = vmatprep.subr.mxu0 0.0
    %v2052 = vand.u32 %v1614, 4294901760
    %v2053 = vsub.f32 %v1614, %v2052
    %v2054 = vand.u32 %v2053, 4294901760
    %2055 = vmatpush1.msra.mxu0 %v2054
    %2056 = vmatprep.subr.mxu0 0.0
    %v2057 = vand.u32 %v1613, 4294901760
    %v2058 = vsub.f32 %v1613, %v2057
    %v2059 = vand.u32 %v2058, 4294901760
    %2060 = vmatpush1.msra.mxu0 %v2059
    %2061 = vmatprep.subr.mxu0 0.0
    %v2062 = vand.u32 %v1612, 4294901760
    %v2063 = vsub.f32 %v1612, %v2062
    %v2064 = vand.u32 %v2063, 4294901760
    %2065 = vmatpush1.msra.mxu0 %v2064
    %2066 = vmatprep.subr.mxu0 0.0
    %v2067 = vand.u32 %v1611, 4294901760
    %v2068 = vsub.f32 %v1611, %v2067
    %v2069 = vand.u32 %v2068, 4294901760
    %2070 = vmatpush1.msra.mxu0 %v2069
    %2071 = vmatprep.subr.mxu0 0.0
    %v2072 = vand.u32 %v1610, 4294901760
    %v2073 = vsub.f32 %v1610, %v2072
    %v2074 = vand.u32 %v2073, 4294901760
    %2075 = vmatpush1.msra.mxu0 %v2074
    %2076 = vmatprep.subr.mxu0 0.0
    %v2077 = vand.u32 %v1609, 4294901760
    %v2078 = vsub.f32 %v1609, %v2077
    %v2079 = vand.u32 %v2078, 4294901760
    %2080 = vmatpush1.msra.mxu0 %v2079
    %2081 = vmatprep.subr.mxu0 0.0
    %v2082 = vand.u32 %v1608, 4294901760
    %v2083 = vsub.f32 %v1608, %v2082
    %v2084 = vand.u32 %v2083, 4294901760
    %2085 = vmatpush1.msra.mxu0 %v2084
    %2086 = vmatprep.subr.mxu0 0.0
    %v2087 = vand.u32 %v1607, 4294901760
    %v2088 = vsub.f32 %v1607, %v2087
    %v2089 = vand.u32 %v2088, 4294901760
    %2090 = vmatpush1.msra.mxu0 %v2089
    %2091 = vmatprep.subr.mxu0 0.0
    %v2092 = vand.u32 %v1606, 4294901760
    %v2093 = vsub.f32 %v1606, %v2092
    %v2094 = vand.u32 %v2093, 4294901760
    %2095 = vmatpush1.msra.mxu0 %v2094
    %2096 = vmatprep.subr.mxu0 0.0
    %v2097 = vand.u32 %v1605, 4294901760
    %v2098 = vsub.f32 %v1605, %v2097
    %v2099 = vand.u32 %v2098, 4294901760
    %2100 = vmatpush1.msra.mxu0 %v2099
    %2101 = vmatprep.subr.mxu0 0.0
    %v2102 = vand.u32 %v1604, 4294901760
    %v2103 = vsub.f32 %v1604, %v2102
    %v2104 = vand.u32 %v2103, 4294901760
    %2105 = vmatpush1.msra.mxu0 %v2104
    %2106 = vmatprep.subr.mxu0 0.0
    %v2107 = vand.u32 %v1603, 4294901760
    %v2108 = vsub.f32 %v1603, %v2107
    %v2109 = vand.u32 %v2108, 4294901760
    %2110 = vmatpush1.msra.mxu0 %v2109
    %2111 = vmatprep.subr.mxu0 0.0
    %v2112 = vand.u32 %v1602, 4294901760
    %v2113 = vsub.f32 %v1602, %v2112
    %v2114 = vand.u32 %v2113, 4294901760
    %2115 = vmatpush1.msra.mxu0 %v2114
    %2116 = vmatprep.subr.mxu0 0.0
    %v2117 = vand.u32 %v1601, 4294901760
    %v2118 = vsub.f32 %v1601, %v2117
    %v2119 = vand.u32 %v2118, 4294901760
    %2120 = vmatpush1.msra.mxu0 %v2119
    %2121 = vmatprep.subr.mxu0 0.0
    %v2122 = vand.u32 %v1600, 4294901760
    %v2123 = vsub.f32 %v1600, %v2122
    %v2124 = vand.u32 %v2123, 4294901760
    %2125 = vmatpush1.msra.mxu0 %v2124
    %2126 = vmatprep.subr.mxu0 0.0
    %v2127 = vand.u32 %v1599, 4294901760
    %v2128 = vsub.f32 %v1599, %v2127
    %v2129 = vand.u32 %v2128, 4294901760
    %2130 = vmatpush1.msra.mxu0 %v2129
    %2131 = vmatprep.subr.mxu0 0.0
    %2132 = vmatpush2.msra.mxu0 0.0
    %2133 = vmatprep.subr.mxu0 0.0
    %2134 = vmatpush2.msra.mxu0 0.0
    %2135 = vmatprep.subr.mxu0 0.0
    %2136 = vmatpush2.msra.mxu0 0.0
    %2137 = vmatprep.subr.mxu0 0.0
    %2138 = vmatpush2.msra.mxu0 0.0
    %2139 = vmatprep.subr.mxu0 0.0
    %2140 = vmatpush2.msra.mxu0 0.0
    %2141 = vmatprep.subr.mxu0 0.0
    %2142 = vmatpush2.msra.mxu0 0.0
    %2143 = vmatprep.subr.mxu0 0.0
    %2144 = vmatpush2.msra.mxu0 0.0
    %2145 = vmatprep.subr.mxu0 0.0
    %2146 = vmatpush2.msra.mxu0 0.0
    %2147 = vmatprep.subr.mxu0 0.0
    %2148 = vmatpush2.msra.mxu0 0.0
    %2149 = vmatprep.subr.mxu0 0.0
    %2150 = vmatpush2.msra.mxu0 0.0
    %2151 = vmatprep.subr.mxu0 0.0
    %2152 = vmatpush2.msra.mxu0 0.0
    %2153 = vmatprep.subr.mxu0 0.0
    %2154 = vmatpush2.msra.mxu0 0.0
    %2155 = vmatprep.subr.mxu0 0.0
    %2156 = vmatpush2.msra.mxu0 0.0
    %2157 = vmatprep.subr.mxu0 0.0
    %2158 = vmatpush2.msra.mxu0 0.0
    %2159 = vmatprep.subr.mxu0 0.0
    %2160 = vmatpush2.msra.mxu0 0.0
    %2161 = vmatprep.subr.mxu0 0.0
    %2162 = vmatpush2.msra.mxu0 0.0
    %2163 = vmatprep.mubr.f32.mxu0 0.0
    %v2164 = vand.u32 %v1598, 4294901760
    %2165 = vmatmul.mubr.f32.gmra.mxu0 %v2164
    %v2166 = vpop.f32.mrf.mxu0
    %v2167 = vadd.f32 %v2048, %v2166
    %v2168 = vpop.f32.mrf.mxu0
    %2169 = vdwg.mxu0
    %2170 = vmatprep.subr.mxu0 0.0
    %v2171 = vand.u32 %v1614, 4294901760
    %2172 = vmatpush1.msra.mxu0 %v2171
    %2173 = vmatprep.subr.mxu0 0.0
    %v2174 = vand.u32 %v1613, 4294901760
    %2175 = vmatpush1.msra.mxu0 %v2174
    %2176 = vmatprep.subr.mxu0 0.0
    %v2177 = vand.u32 %v1612, 4294901760
    %2178 = vmatpush1.msra.mxu0 %v2177
    %2179 = vmatprep.subr.mxu0 0.0
    %v2180 = vand.u32 %v1611, 4294901760
    %2181 = vmatpush1.msra.mxu0 %v2180
    %2182 = vmatprep.subr.mxu0 0.0
    %v2183 = vand.u32 %v1610, 4294901760
    %2184 = vmatpush1.msra.mxu0 %v2183
    %2185 = vmatprep.subr.mxu0 0.0
    %v2186 = vand.u32 %v1609, 4294901760
    %2187 = vmatpush1.msra.mxu0 %v2186
    %2188 = vmatprep.subr.mxu0 0.0
    %v2189 = vand.u32 %v1608, 4294901760
    %2190 = vmatpush1.msra.mxu0 %v2189
    %2191 = vmatprep.subr.mxu0 0.0
    %v2192 = vand.u32 %v1607, 4294901760
    %2193 = vmatpush1.msra.mxu0 %v2192
    %2194 = vmatprep.subr.mxu0 0.0
    %v2195 = vand.u32 %v1606, 4294901760
    %2196 = vmatpush1.msra.mxu0 %v2195
    %2197 = vmatprep.subr.mxu0 0.0
    %v2198 = vand.u32 %v1605, 4294901760
    %2199 = vmatpush1.msra.mxu0 %v2198
    %2200 = vmatprep.subr.mxu0 0.0
    %v2201 = vand.u32 %v1604, 4294901760
    %2202 = vmatpush1.msra.mxu0 %v2201
    %2203 = vmatprep.subr.mxu0 0.0
    %v2204 = vand.u32 %v1603, 4294901760
    %2205 = vmatpush1.msra.mxu0 %v2204
    %2206 = vmatprep.subr.mxu0 0.0
    %v2207 = vand.u32 %v1602, 4294901760
    %2208 = vmatpush1.msra.mxu0 %v2207
    %2209 = vmatprep.subr.mxu0 0.0
    %v2210 = vand.u32 %v1601, 4294901760
    %2211 = vmatpush1.msra.mxu0 %v2210
    %2212 = vmatprep.subr.mxu0 0.0
    %v2213 = vand.u32 %v1600, 4294901760
    %2214 = vmatpush1.msra.mxu0 %v2213
    %2215 = vmatprep.subr.mxu0 0.0
    %v2216 = vand.u32 %v1599, 4294901760
    %2217 = vmatpush1.msra.mxu0 %v2216
    %2218 = vmatprep.subr.mxu0 0.0
    %2219 = vmatpush2.msra.mxu0 0.0
    %2220 = vmatprep.subr.mxu0 0.0
    %2221 = vmatpush2.msra.mxu0 0.0
    %2222 = vmatprep.subr.mxu0 0.0
    %2223 = vmatpush2.msra.mxu0 0.0
    %2224 = vmatprep.subr.mxu0 0.0
    %2225 = vmatpush2.msra.mxu0 0.0
    %2226 = vmatprep.subr.mxu0 0.0
    %2227 = vmatpush2.msra.mxu0 0.0
    %2228 = vmatprep.subr.mxu0 0.0
    %2229 = vmatpush2.msra.mxu0 0.0
    %2230 = vmatprep.subr.mxu0 0.0
    %2231 = vmatpush2.msra.mxu0 0.0
    %2232 = vmatprep.subr.mxu0 0.0
    %2233 = vmatpush2.msra.mxu0 0.0
    %2234 = vmatprep.subr.mxu0 0.0
    %2235 = vmatpush2.msra.mxu0 0.0
    %2236 = vmatprep.subr.mxu0 0.0
    %2237 = vmatpush2.msra.mxu0 0.0
    %2238 = vmatprep.subr.mxu0 0.0
    %2239 = vmatpush2.msra.mxu0 0.0
    %2240 = vmatprep.subr.mxu0 0.0
    %2241 = vmatpush2.msra.mxu0 0.0
    %2242 = vmatprep.subr.mxu0 0.0
    %2243 = vmatpush2.msra.mxu0 0.0
    %2244 = vmatprep.subr.mxu0 0.0
    %2245 = vmatpush2.msra.mxu0 0.0
    %2246 = vmatprep.subr.mxu0 0.0
    %2247 = vmatpush2.msra.mxu0 0.0
    %2248 = vmatprep.subr.mxu0 0.0
    %2249 = vmatpush2.msra.mxu0 0.0
    %2250 = vmatprep.mubr.f32.mxu0 0.0
    %v2251 = vand.u32 %v1598, 4294901760
    %2252 = vmatmul.mubr.f32.gmra.mxu0 %v2251
    %v2253 = vpop.f32.mrf.mxu0
    %v2254 = vadd.f32 %v2167, %v2253
    %v2255 = vpop.f32.mrf.mxu0
    %2256 = vdwg.mxu0
    %2257 = vst.msk [vmem:[#allocation5] sm:$0xff] %vm34, %v2254
    // Predicated region
    $region18: #{forward.1} parent=1 // pred_check
      _
    $region19: #{forward.1} parent=1 // pred_check_branch
      %2259 = sbr.rel (0) target = $region21
    $region20: #{forward.1} parent=1 // pred_region
      %s2261 = ssub.s32 128, 128
      %2262 = vsyncadd [#allocation4], %s2261
      %s2264 = sshll.u32 [#allocation5], 4
      %s2265 = int_to_ptr.vmem [resolvable:$true] %s2264
      %2267 = dma.vmem_to_hbm [thread:$0]  %s2265, 128, %s3, [#allocation4]
    $region21: #{forward.1} parent=1 // pred_fallthru
      _
    // Predicated region
    $region22: #{forward.1} parent=1 // pred_check
      _
    $region23: #{forward.1} parent=1 // pred_check_branch
      %2269 = sbr.rel (0) target = $region25
    $region24: #{forward.1} parent=1 // pred_region
      %2270 = dma.done [#allocation4], 128
    $region25: #{forward.1} parent=1 // pred_fallthru
      _
    %2271 = vsyncpa [#allocation3], 1
    %2272 = vsyncpa [#allocation4], 1

</llo_original>
